<compile_context>
chip_gen: v7x
topology: tpu7x:2x2x1
jax: 0.10.0
libtpu: 0.0.40
codegen_flags: <defaults>
</compile_context>

<pallas_src>
import jax
import jax.numpy as jnp
from jax.experimental import pallas as pl
from jax.experimental.pallas import tpu as pltpu


def pinn_mlp_kernel(coords_ref, w0_ref, b0_ref, whbd_ref, bhbd_ref, wfp_ref,
                    bf_ref, out_ref):
    """One batch tile of the PINN MLP forward pass.

    coords_ref : (2R, TN)      rows [0:R] = t sub-batches, rows [R:2R] = x
    w0_ref     : (H, 2)        first Linear weight (torch layout), f32
    b0_ref     : (H, 1)        f32
    whbd_ref   : (L, RH, RH)   block-diagonal hidden weights, bfloat16
    bhbd_ref   : (L, RH, 1)    R-tiled hidden biases, f32
    wfp_ref    : (RH, 1)       R-tiled final weight column, f32
    bf_ref     : (1, 1)        f32
    out_ref    : (R, TN)       f32
    """
    H = w0_ref.shape[0]
    RH = whbd_ref.shape[1]
    R = RH // H
    TN = out_ref.shape[-1]
    L = whbd_ref.shape[0]

    coords = coords_ref[...]                         # (2R, TN)
    t_blk = coords[:R, :][:, None, :]                # (R, 1, TN)
    x_blk = coords[R:, :][:, None, :]                # (R, 1, TN)

    w0 = w0_ref[...]                                 # (H, 2)
    w0t = w0[:, 0:1].reshape(1, H, 1)                # (1, H, 1)
    w0x = w0[:, 1:2].reshape(1, H, 1)
    b0 = b0_ref[...].reshape(1, H, 1)

    # First layer: K=2 contraction as VPU broadcast FMAs per 32-row block.
    pre = w0t * t_blk + w0x * x_blk + b0             # (R, H, TN) f32
    h = jnp.tanh(pre).reshape(RH, TN)                # (RH, TN)  f32

    # Hidden layers: block-diagonal bf16 matmul on the MXU, f32 accumulation.
    for l in range(L):
        z = jnp.dot(whbd_ref[l], h.astype(jnp.bfloat16),
                    preferred_element_type=jnp.float32)
        h = jnp.tanh(z + bhbd_ref[l])                # (RH, TN) f32

    # Final layer: VPU multiply + per-block sublane reduce (no N=1 MXU matmul).
    prod = wfp_ref[...] * h                          # (RH, TN)
    out = prod.reshape(R, H, TN).sum(axis=1)         # (R, TN)
    out_ref[...] = out + bf_ref[...]


def _pick_tile(lanes, max_tile=2048):
    """Largest multiple of 128 dividing `lanes` (capped), preferring an even
    grid with >= 2 steps so v7x's two TensorCores stay balanced."""
    divisors = [d for d in range(128, min(lanes, max_tile) + 1, 128)
                if lanes % d == 0]
    if not divisors:
        return None
    for want_even in (True, False):
        cands = [d for d in divisors
                 if lanes // d >= 2 and (not want_even or (lanes // d) % 2 == 0)]
        if cands:
            return max(cands)
    return max(divisors)


def pinn_forward(t, x, params, *, r_pack=8, tile_n=None):
    """Pallas-backed equivalent of PINN_1D_Burgers.forward(t, x) -> (N, 1).

    r_pack: batch sub-tiles packed on the sublane axis (8 for v6e/v7x's
    256-wide MXU, 4 for v5e's 128-wide MXU).
    """
    w0, b0, wh, bh, wf, bf = params
    n = t.shape[0]
    H = w0.shape[0]
    L = wh.shape[0]
    R = r_pack
    RH = R * H

    assert n % (R * 128) == 0, "pad N to a multiple of r_pack*128"
    lanes = n // R
    if tile_n is None:
        tile_n = _pick_tile(lanes)
    assert tile_n is not None and lanes % tile_n == 0

    # Fused (2R, lanes) coordinate slab: one DMA per tile, 2R dense sublanes.
    coords = jnp.concatenate([t.reshape(R, lanes), x.reshape(R, lanes)], axis=0)

    # Host-side packed parameters.
    eye = jnp.eye(R, dtype=wh.dtype)
    wh_bd = jnp.einsum('rs,lij->lrisj', eye, wh).reshape(L, RH, RH)
    wh_bd = wh_bd.astype(jnp.bfloat16)               # bf16 MXU operands
    bh_bd = jnp.tile(bh, (1, R, 1))                  # (L, RH, 1) f32
    wf_p = jnp.tile(wf, (R, 1))                      # (RH, 1) f32

    flops = n * (2 * 2 * H + L * 2 * H * H + 2 * H)
    transcendentals = n * (L + 1) * H
    bytes_accessed = (coords.size * 4 + n * 4 + wh_bd.size * 2
                      + (bh_bd.size + wf_p.size + w0.size + b0.size + bf.size) * 4)

    grid = (lanes // tile_n,)
    out = pl.pallas_call(
        pinn_mlp_kernel,
        out_shape=jax.ShapeDtypeStruct((R, lanes), jnp.float32),
        grid_spec=pltpu.PrefetchScalarGridSpec(
            num_scalar_prefetch=0,
            grid=grid,
            in_specs=[
                pl.BlockSpec((2 * R, tile_n), lambda i: (0, i)),   # coords
                pl.BlockSpec((H, 2), lambda i: (0, 0)),            # w0
                pl.BlockSpec((H, 1), lambda i: (0, 0)),            # b0
                pl.BlockSpec((L, RH, RH), lambda i: (0, 0, 0)),    # wh block-diag
                pl.BlockSpec((L, RH, 1), lambda i: (0, 0, 0)),     # bh tiled
                pl.BlockSpec((RH, 1), lambda i: (0, 0)),           # wf tiled
                pl.BlockSpec((1, 1), lambda i: (0, 0)),            # bf
            ],
            out_specs=pl.BlockSpec((R, tile_n), lambda i: (0, i)),
        ),
        compiler_params=pltpu.CompilerParams(
            dimension_semantics=("parallel",)),
        cost_estimate=pl.CostEstimate(
            flops=int(flops),
            transcendentals=int(transcendentals),
            bytes_accessed=int(bytes_accessed)),
    )(coords, w0, b0, wh_bd, bh_bd, wf_p, bf)

    # out[r, c] = u(point r*lanes + c): row-major reshape restores (N, 1) order.
    return out.reshape(n, 1)


def init_params(key, hidden_layers, nodes_per_layer):
    """Deterministic synthetic parameters in torch-native (out, in) layout."""
    H = nodes_per_layer
    keys = jax.random.split(key, 6)
    w0 = jax.random.normal(keys[0], (H, 2), jnp.float32) * 0.5
    b0 = jax.random.normal(keys[1], (H, 1), jnp.float32) * 0.1
    wh = jax.random.normal(keys[2], (hidden_layers, H, H), jnp.float32) * (1.0 / jnp.sqrt(H))
    bh = jax.random.normal(keys[3], (hidden_layers, H, 1), jnp.float32) * 0.1
    wf = jax.random.normal(keys[4], (H, 1), jnp.float32) * (1.0 / jnp.sqrt(H))
    bf = jax.random.normal(keys[5], (1, 1), jnp.float32) * 0.1
    return (w0, b0, wh, bh, wf, bf)


def reference_forward(t, x, params):
    """Pure-JAX reference with the same numeric choices as the kernel
    (f32 elementwise first/last layer, bf16 MXU operands with f32 acc)."""
    w0, b0, wh, bh, wf, bf = params
    h = jnp.tanh(t[:, None] * w0[:, 0][None, :]
                 + x[:, None] * w0[:, 1][None, :]
                 + b0[:, 0][None, :])                              # (N, H)
    for l in range(wh.shape[0]):
        z = jnp.dot(h.astype(jnp.bfloat16), wh[l].T.astype(jnp.bfloat16),
                    preferred_element_type=jnp.float32)
        h = jnp.tanh(z + bh[l][:, 0][None, :])                     # (N, H)
    return jnp.sum(h * wf[:, 0][None, :], axis=1, keepdims=True) + bf


if __name__ == "__main__":
    # Forward-implied shapes: N collocation points with (t, x) coordinates,
    # hiddenLayers=2, nodesPerLayer=32.  N is a multiple of r_pack*128.
    key = jax.random.PRNGKey(0)
    k_t, k_x, k_p = jax.random.split(key, 3)

    N = 2048
    hidden_layers = 2
    nodes_per_layer = 32

    t = jax.random.uniform(k_t, (N,), jnp.float32)               # time coords
    x = jax.random.uniform(k_x, (N,), jnp.float32) * 2.0 - 1.0   # space coords
    params = init_params(k_p, hidden_layers, nodes_per_layer)

    u = pinn_forward(t, x, params)        # r_pack=8 -> lanes=256, grid=(2,)
    u = jax.block_until_ready(u)

    # Correctness check (bf16 MXU operands are intentional; tolerance reflects
    # one-bf16-ULP rounding differences between EUP/XLA tanh feeding the cast).
    u_ref = reference_forward(t, x, params)
    assert u.shape == (N, 1)
    assert jnp.allclose(u, u_ref, atol=2e-3, rtol=1e-3), "mismatch vs reference"

    # TODO(synk): residual()/lossFunc()/trainer() rely on torch.autograd and
    # LBFGS; they are training-time machinery, not part of the forward kernel.

    print("KERNEL_OK")
</pallas_src>

<mosaic_0001>
module attributes {stable_mosaic.version = 11 : i64} {
  func.func @pinn_mlp_kernel(%arg0: i32, %arg1: memref<16x128xf32, #tpu.memory_space<vmem>>, %arg2: memref<32x2xf32, #tpu.memory_space<vmem>>, %arg3: memref<32x1xf32, #tpu.memory_space<vmem>>, %arg4: memref<2x256x256xbf16, #tpu.memory_space<vmem>>, %arg5: memref<2x256x1xf32, #tpu.memory_space<vmem>>, %arg6: memref<256x1xf32, #tpu.memory_space<vmem>>, %arg7: memref<1x1xf32, #tpu.memory_space<vmem>>, %arg8: memref<8x128xf32, #tpu.memory_space<vmem>>) attributes {dimension_semantics = [#tpu.dimension_semantics<parallel>], iteration_bounds = array<i64: 2>, scalar_prefetch = 0 : i64, scratch_operands = 0 : i64, tpu.core_type = #tpu.core_type<tc>, window_params = [{transform_indices = @transform_0, window_bounds = array<i64: 16, 128>}, {pipeline_mode = #tpu.pipeline_mode<synchronous>, transform_indices = @transform_1, window_bounds = array<i64: 32, 2>}, {pipeline_mode = #tpu.pipeline_mode<synchronous>, transform_indices = @transform_2, window_bounds = array<i64: 32, 1>}, {pipeline_mode = #tpu.pipeline_mode<synchronous>, transform_indices = @transform_3, window_bounds = array<i64: 2, 256, 256>}, {pipeline_mode = #tpu.pipeline_mode<synchronous>, transform_indices = @transform_4, window_bounds = array<i64: 2, 256, 1>}, {pipeline_mode = #tpu.pipeline_mode<synchronous>, transform_indices = @transform_5, window_bounds = array<i64: 256, 1>}, {pipeline_mode = #tpu.pipeline_mode<synchronous>, transform_indices = @transform_6, window_bounds = array<i64: 1, 1>}, {transform_indices = @transform_7, window_bounds = array<i64: 8, 128>}]} {
    %c0 = arith.constant 0 : index
    %c0_0 = arith.constant 0 : index
    %0 = vector.load %arg1[%c0, %c0_0] : memref<16x128xf32, #tpu.memory_space<vmem>>, vector<16x128xf32>
    %1 = vector.extract_strided_slice %0 {offsets = [0, 0], sizes = [8, 128], strides = [1, 1]} : vector<16x128xf32> to vector<8x128xf32>
    %2 = vector.shape_cast %1 : vector<8x128xf32> to vector<8x1x128xf32>
    %3 = vector.extract_strided_slice %0 {offsets = [8, 0], sizes = [8, 128], strides = [1, 1]} : vector<16x128xf32> to vector<8x128xf32>
    %4 = vector.shape_cast %3 : vector<8x128xf32> to vector<8x1x128xf32>
    %c0_1 = arith.constant 0 : index
    %c0_2 = arith.constant 0 : index
    %5 = vector.load %arg2[%c0_1, %c0_2] : memref<32x2xf32, #tpu.memory_space<vmem>>, vector<32x2xf32>
    %6 = vector.extract_strided_slice %5 {offsets = [0, 0], sizes = [32, 1], strides = [1, 1]} : vector<32x2xf32> to vector<32x1xf32>
    %7 = vector.shape_cast %6 : vector<32x1xf32> to vector<1x32x1xf32>
    %8 = vector.extract_strided_slice %5 {offsets = [0, 1], sizes = [32, 1], strides = [1, 1]} : vector<32x2xf32> to vector<32x1xf32>
    %9 = vector.shape_cast %8 : vector<32x1xf32> to vector<1x32x1xf32>
    %c0_3 = arith.constant 0 : index
    %c0_4 = arith.constant 0 : index
    %10 = vector.load %arg3[%c0_3, %c0_4] : memref<32x1xf32, #tpu.memory_space<vmem>>, vector<32x1xf32>
    %11 = vector.shape_cast %10 : vector<32x1xf32> to vector<1x32x1xf32>
    %12 = vector.broadcast %7 : vector<1x32x1xf32> to vector<8x32x128xf32>
    %13 = vector.broadcast %2 : vector<8x1x128xf32> to vector<8x32x128xf32>
    %14 = arith.mulf %12, %13 : vector<8x32x128xf32>
    %15 = vector.broadcast %9 : vector<1x32x1xf32> to vector<8x32x128xf32>
    %16 = vector.broadcast %4 : vector<8x1x128xf32> to vector<8x32x128xf32>
    %17 = arith.mulf %15, %16 : vector<8x32x128xf32>
    %18 = arith.addf %14, %17 : vector<8x32x128xf32>
    %19 = vector.broadcast %11 : vector<1x32x1xf32> to vector<8x32x128xf32>
    %20 = arith.addf %18, %19 : vector<8x32x128xf32>
    %21 = math.tanh %20 : vector<8x32x128xf32>
    %22 = vector.shape_cast %21 : vector<8x32x128xf32> to vector<256x128xf32>
    %c0_5 = arith.constant 0 : index
    %c0_6 = arith.constant 0 : index
    %c0_7 = arith.constant 0 : index
    %23 = vector.load %arg4[%c0_5, %c0_6, %c0_7] : memref<2x256x256xbf16, #tpu.memory_space<vmem>>, vector<1x256x256xbf16>
    %24 = vector.shape_cast %23 : vector<1x256x256xbf16> to vector<256x256xbf16>
    %25 = arith.truncf %22 : vector<256x128xf32> to vector<256x128xbf16>
    %cst = arith.constant dense<0.000000e+00> : vector<256x128xf32>
    %26 = tpu.matmul %24, %25, %cst {dimension_numbers = #tpu.dot_dimension_numbers<[1], [0], [0], [1], [0, 0, 1, 1], [], []>} : vector<256x256xbf16>, vector<256x128xbf16>, vector<256x128xf32> -> vector<256x128xf32>
    %c0_8 = arith.constant 0 : index
    %c0_9 = arith.constant 0 : index
    %c0_10 = arith.constant 0 : index
    %27 = vector.load %arg5[%c0_8, %c0_9, %c0_10] : memref<2x256x1xf32, #tpu.memory_space<vmem>>, vector<1x256x1xf32>
    %28 = vector.shape_cast %27 : vector<1x256x1xf32> to vector<256x1xf32>
    %29 = vector.broadcast %28 : vector<256x1xf32> to vector<256x128xf32>
    %30 = arith.addf %26, %29 : vector<256x128xf32>
    %31 = math.tanh %30 : vector<256x128xf32>
    %c1 = arith.constant 1 : index
    %c0_11 = arith.constant 0 : index
    %c0_12 = arith.constant 0 : index
    %32 = vector.load %arg4[%c1, %c0_11, %c0_12] : memref<2x256x256xbf16, #tpu.memory_space<vmem>>, vector<1x256x256xbf16>
    %33 = vector.shape_cast %32 : vector<1x256x256xbf16> to vector<256x256xbf16>
    %34 = arith.truncf %31 : vector<256x128xf32> to vector<256x128xbf16>
    %cst_13 = arith.constant dense<0.000000e+00> : vector<256x128xf32>
    %35 = tpu.matmul %33, %34, %cst_13 {dimension_numbers = #tpu.dot_dimension_numbers<[1], [0], [0], [1], [0, 0, 1, 1], [], []>} : vector<256x256xbf16>, vector<256x128xbf16>, vector<256x128xf32> -> vector<256x128xf32>
    %c1_14 = arith.constant 1 : index
    %c0_15 = arith.constant 0 : index
    %c0_16 = arith.constant 0 : index
    %36 = vector.load %arg5[%c1_14, %c0_15, %c0_16] : memref<2x256x1xf32, #tpu.memory_space<vmem>>, vector<1x256x1xf32>
    %37 = vector.shape_cast %36 : vector<1x256x1xf32> to vector<256x1xf32>
    %38 = vector.broadcast %37 : vector<256x1xf32> to vector<256x128xf32>
    %39 = arith.addf %35, %38 : vector<256x128xf32>
    %40 = math.tanh %39 : vector<256x128xf32>
    %c0_17 = arith.constant 0 : index
    %c0_18 = arith.constant 0 : index
    %41 = vector.load %arg6[%c0_17, %c0_18] : memref<256x1xf32, #tpu.memory_space<vmem>>, vector<256x1xf32>
    %42 = vector.broadcast %41 : vector<256x1xf32> to vector<256x128xf32>
    %43 = arith.mulf %42, %40 : vector<256x128xf32>
    %44 = vector.shape_cast %43 : vector<256x128xf32> to vector<8x32x128xf32>
    %cst_19 = arith.constant dense<0.000000e+00> : vector<8x128xf32>
    %45 = vector.multi_reduction <add>, %44, %cst_19 [1] : vector<8x32x128xf32> to vector<8x128xf32>
    %c0_20 = arith.constant 0 : index
    %c0_21 = arith.constant 0 : index
    %46 = vector.load %arg7[%c0_20, %c0_21] : memref<1x1xf32, #tpu.memory_space<vmem>>, vector<1x1xf32>
    %47 = vector.broadcast %46 : vector<1x1xf32> to vector<8x128xf32>
    %48 = arith.addf %45, %47 : vector<8x128xf32>
    %c0_22 = arith.constant 0 : index
    %c0_23 = arith.constant 0 : index
    %49 = vector.load %arg8[%c0_22, %c0_23] : memref<8x128xf32, #tpu.memory_space<vmem>>, vector<8x128xf32>
    tpu.vector_store %arg8[%c0_22, %c0_23], %48 {strides = array<i32>} : memref<8x128xf32, #tpu.memory_space<vmem>>, vector<8x128xf32>,
    return
  }
  func.func @transform_0(%arg0: i32) -> (i32, i32) {
    %c0_i32 = arith.constant 0 : i32
    %c0_i32_0 = arith.constant 0 : i32
    return %c0_i32, %arg0 : i32, i32
  }
  func.func @transform_1(%arg0: i32) -> (i32, i32) {
    %c0_i32 = arith.constant 0 : i32
    %c0_i32_0 = arith.constant 0 : i32
    %c0_i32_1 = arith.constant 0 : i32
    return %c0_i32, %c0_i32_0 : i32, i32
  }
  func.func @transform_2(%arg0: i32) -> (i32, i32) {
    %c0_i32 = arith.constant 0 : i32
    %c0_i32_0 = arith.constant 0 : i32
    %c0_i32_1 = arith.constant 0 : i32
    return %c0_i32, %c0_i32_0 : i32, i32
  }
  func.func @transform_3(%arg0: i32) -> (i32, i32, i32) {
    %c0_i32 = arith.constant 0 : i32
    %c0_i32_0 = arith.constant 0 : i32
    %c0_i32_1 = arith.constant 0 : i32
    %c0_i32_2 = arith.constant 0 : i32
    return %c0_i32, %c0_i32_0, %c0_i32_1 : i32, i32, i32
  }
  func.func @transform_4(%arg0: i32) -> (i32, i32, i32) {
    %c0_i32 = arith.constant 0 : i32
    %c0_i32_0 = arith.constant 0 : i32
    %c0_i32_1 = arith.constant 0 : i32
    %c0_i32_2 = arith.constant 0 : i32
    return %c0_i32, %c0_i32_0, %c0_i32_1 : i32, i32, i32
  }
  func.func @transform_5(%arg0: i32) -> (i32, i32) {
    %c0_i32 = arith.constant 0 : i32
    %c0_i32_0 = arith.constant 0 : i32
    %c0_i32_1 = arith.constant 0 : i32
    return %c0_i32, %c0_i32_0 : i32, i32
  }
  func.func @transform_6(%arg0: i32) -> (i32, i32) {
    %c0_i32 = arith.constant 0 : i32
    %c0_i32_0 = arith.constant 0 : i32
    %c0_i32_1 = arith.constant 0 : i32
    return %c0_i32, %c0_i32_0 : i32, i32
  }
  func.func @transform_7(%arg0: i32) -> (i32, i32) {
    %c0_i32 = arith.constant 0 : i32
    %c0_i32_0 = arith.constant 0 : i32
    return %c0_i32, %arg0 : i32, i32
  }
}

</mosaic_0001>

<llo_original>
// kernel: tpu_custom_call.1
$region0: #{tpu_custom_call.1}
  #allocation0 [shape = 'u32[]', space=smem, size = 0x4, offset = 0x4, fixed_abs, tag = 'smem constant byte address 0x4 - core index']
  #allocation1 [shape = 'u32[144,128]{1,0:T(1,128)}', space=vmem, size = 0x12000, scoped, tag = 'internal scratch']
  #allocation2 [shape = 'f32[1,1]{1,0:T(1,128)S(1)}', space=vmem, size = 0x200, scoped, tag = 'scoped memory for tpu_custom_call.1']
  %s0 = inlined_call_operand.vmem [shape: f32[16,256], index: 0, kind: input, shape index: {}]
  %s1 = inlined_call_operand.vmem [shape: f32[32,2], index: 1, kind: input, shape index: {}]
  %s2 = inlined_call_operand.vmem [shape: f32[32,1], index: 2, kind: input, shape index: {}]
  %s3 = inlined_call_operand.vmem [shape: bf16[2,256,256], index: 3, kind: input, shape index: {}]
  %s4 = inlined_call_operand.vmem [shape: f32[2,256,1], index: 4, kind: input, shape index: {}]
  %s5 = inlined_call_operand.vmem [shape: f32[256,1], index: 5, kind: input, shape index: {}]
  %s6 = inlined_call_operand.<no memory space> [shape: f32[1,1], index: 6, kind: input, shape index: {}]
  %s7 = inlined_call_operand.hbm [shape: f32[8,256], index: 7, kind: output, shape index: {}]
  %s8 = sld [smem:[#allocation0]]
  $region99: #{tpu_custom_call.1} parent=0
    _
  %s10 = ssub.s32 1, %s8
  %s11 = scalar_select 0, %s10, %s8
  %v12 = vstv %s6
  %13 = vst [vmem:[#allocation2] sm:$0x1] %v12
  $region1: #{tpu_custom_call.1} parent=0
    #allocation3 [shape = 'u8[16384]{0}', space=vmem, size = 0x4000, scoped, tag = 'input window, operand 0']
    #allocation4 [shape = 'u8[8192]{0}', space=vmem, size = 0x2000, scoped, tag = 'output window, operand 0']
    #allocation5 [shape = 's32[2]{0}', space=sflag, size = 0x8, scoped, tag = 'scoped memory for tpu_custom_call.1']
    %14 = vsyncpa [#allocation5], 0
    %s15 = scalar_lea.sflag [#allocation5], 1
    %16 = vsyncpa %s15, 0
    loop: start=0, step=1, limit=4
    $region2: #{tpu_custom_call.1} parent=1 // loop_pre_header
      _
    $region3: #{tpu_custom_call.1} parent=1 // loop_header
      %s18 = sphi 0, %s22
      %p19 = scmp.ge.s32.totalorder %s18, 4
      %s28 = sphi 0, %s30
      %s31 = sphi 0, %s28
      %s32 = sphi 0, %s31
      %s48 = sphi 0, %s32
      %s52 = sphi 0, %s52
      %s54 = sphi 0, %s52
      %s55 = sphi 0, %s54
      %s69 = sphi 0, %s55
      %s73 = sphi 0, %s73
      %s75 = sphi 0, %s73
      %s76 = sphi 0, %s75
      %s90 = sphi 0, %s76
      %s94 = sphi 0, %s94
      %s96 = sphi 0, %s94
      %s97 = sphi 0, %s96
      %s111 = sphi 0, %s97
      %s115 = sphi 0, %s115
      %s117 = sphi 0, %s115
      %s118 = sphi 0, %s117
      %s132 = sphi 0, %s118
      %s136 = sphi 0, %s136
      %s138 = sphi 0, %s136
      %s139 = sphi 0, %s138
      %s153 = sphi 0, %s139
      %s157 = sphi 0, %s157
      %s159 = sphi 0, %s157
      %s160 = sphi 0, %s159
      %s174 = sphi 0, %s160
      %s180 = sphi 0, %s182
      %s183 = sphi 0, %s180
      %s184 = sphi 0, %s183
      %s200 = sphi 0, %s184
    $region4: #{tpu_custom_call.1} parent=1 // loop_header_branch
      %21 = sbr.rel (%p19) target = $region8
    $region5: #{tpu_custom_call.1} parent=1 // loop_body
      %s23 = ssub.s32 %s18, 1
      %s24 = ssub.s32 %s18, 2
      %s25 = sadd.s32 %s18, 1
      %s26 = ssub.s32 %s18, %s25
      %p27 = scmp.eq.s32.totalorder %s26, 0
      %s29 = sadd.s32 %s28, 1
      %s30 = scalar_select %p27, %s28, %s29
      %p33 = pneg %p27
      %p34 = scmp.eq.s32.totalorder %s18, 1
      %p35 = por %p33, %p34
      %p36 = scmp.ne.s32.totalorder %s28, %s31
      %p37 = scmp.eq.s32.totalorder %s18, 0
      %p38 = por %p36, %p37
      %p39 = scmp.ne.s32.totalorder %s28, %s31
      %p40 = scmp.eq.s32.totalorder %s23, 1
      %p41 = por %p39, %p40
      %p42 = scmp.ne.s32.totalorder %s31, %s32
      %p43 = scmp.eq.s32.totalorder %s23, 0
      %p44 = por %p42, %p43
      %p45 = scmp.ne.s32.totalorder %s31, %s32
      %p46 = scmp.eq.s32.totalorder %s24, 1
      %p47 = por %p45, %p46
      %p49 = scmp.ne.s32.totalorder %s32, %s48
      %p50 = scmp.eq.s32.totalorder %s24, 0
      %p51 = por %p49, %p50
      %s53 = sadd.s32 %s52, 1
      %p56 = scmp.eq.s32.totalorder %s18, 1
      %p57 = scmp.ne.s32.totalorder %s52, %s54
      %p58 = scmp.eq.s32.totalorder %s18, 0
      %p59 = por %p57, %p58
      %p60 = scmp.ne.s32.totalorder %s52, %s54
      %p61 = scmp.eq.s32.totalorder %s23, 1
      %p62 = por %p60, %p61
      %p63 = scmp.ne.s32.totalorder %s54, %s55
      %p64 = scmp.eq.s32.totalorder %s23, 0
      %p65 = por %p63, %p64
      %p66 = scmp.ne.s32.totalorder %s54, %s55
      %p67 = scmp.eq.s32.totalorder %s24, 1
      %p68 = por %p66, %p67
      %p70 = scmp.ne.s32.totalorder %s55, %s69
      %p71 = scmp.eq.s32.totalorder %s24, 0
      %p72 = por %p70, %p71
      %s74 = sadd.s32 %s73, 1
      %p77 = scmp.eq.s32.totalorder %s18, 1
      %p78 = scmp.ne.s32.totalorder %s73, %s75
      %p79 = scmp.eq.s32.totalorder %s18, 0
      %p80 = por %p78, %p79
      %p81 = scmp.ne.s32.totalorder %s73, %s75
      %p82 = scmp.eq.s32.totalorder %s23, 1
      %p83 = por %p81, %p82
      %p84 = scmp.ne.s32.totalorder %s75, %s76
      %p85 = scmp.eq.s32.totalorder %s23, 0
      %p86 = por %p84, %p85
      %p87 = scmp.ne.s32.totalorder %s75, %s76
      %p88 = scmp.eq.s32.totalorder %s24, 1
      %p89 = por %p87, %p88
      %p91 = scmp.ne.s32.totalorder %s76, %s90
      %p92 = scmp.eq.s32.totalorder %s24, 0
      %p93 = por %p91, %p92
      %s95 = sadd.s32 %s94, 1
      %p98 = scmp.eq.s32.totalorder %s18, 1
      %p99 = scmp.ne.s32.totalorder %s94, %s96
      %p100 = scmp.eq.s32.totalorder %s18, 0
      %p101 = por %p99, %p100
      %p102 = scmp.ne.s32.totalorder %s94, %s96
      %p103 = scmp.eq.s32.totalorder %s23, 1
      %p104 = por %p102, %p103
      %p105 = scmp.ne.s32.totalorder %s96, %s97
      %p106 = scmp.eq.s32.totalorder %s23, 0
      %p107 = por %p105, %p106
      %p108 = scmp.ne.s32.totalorder %s96, %s97
      %p109 = scmp.eq.s32.totalorder %s24, 1
      %p110 = por %p108, %p109
      %p112 = scmp.ne.s32.totalorder %s97, %s111
      %p113 = scmp.eq.s32.totalorder %s24, 0
      %p114 = por %p112, %p113
      %s116 = sadd.s32 %s115, 1
      %p119 = scmp.eq.s32.totalorder %s18, 1
      %p120 = scmp.ne.s32.totalorder %s115, %s117
      %p121 = scmp.eq.s32.totalorder %s18, 0
      %p122 = por %p120, %p121
      %p123 = scmp.ne.s32.totalorder %s115, %s117
      %p124 = scmp.eq.s32.totalorder %s23, 1
      %p125 = por %p123, %p124
      %p126 = scmp.ne.s32.totalorder %s117, %s118
      %p127 = scmp.eq.s32.totalorder %s23, 0
      %p128 = por %p126, %p127
      %p129 = scmp.ne.s32.totalorder %s117, %s118
      %p130 = scmp.eq.s32.totalorder %s24, 1
      %p131 = por %p129, %p130
      %p133 = scmp.ne.s32.totalorder %s118, %s132
      %p134 = scmp.eq.s32.totalorder %s24, 0
      %p135 = por %p133, %p134
      %s137 = sadd.s32 %s136, 1
      %p140 = scmp.eq.s32.totalorder %s18, 1
      %p141 = scmp.ne.s32.totalorder %s136, %s138
      %p142 = scmp.eq.s32.totalorder %s18, 0
      %p143 = por %p141, %p142
      %p144 = scmp.ne.s32.totalorder %s136, %s138
      %p145 = scmp.eq.s32.totalorder %s23, 1
      %p146 = por %p144, %p145
      %p147 = scmp.ne.s32.totalorder %s138, %s139
      %p148 = scmp.eq.s32.totalorder %s23, 0
      %p149 = por %p147, %p148
      %p150 = scmp.ne.s32.totalorder %s138, %s139
      %p151 = scmp.eq.s32.totalorder %s24, 1
      %p152 = por %p150, %p151
      %p154 = scmp.ne.s32.totalorder %s139, %s153
      %p155 = scmp.eq.s32.totalorder %s24, 0
      %p156 = por %p154, %p155
      %s158 = sadd.s32 %s157, 1
      %p161 = scmp.eq.s32.totalorder %s18, 1
      %p162 = scmp.ne.s32.totalorder %s157, %s159
      %p163 = scmp.eq.s32.totalorder %s18, 0
      %p164 = por %p162, %p163
      %p165 = scmp.ne.s32.totalorder %s157, %s159
      %p166 = scmp.eq.s32.totalorder %s23, 1
      %p167 = por %p165, %p166
      %p168 = scmp.ne.s32.totalorder %s159, %s160
      %p169 = scmp.eq.s32.totalorder %s23, 0
      %p170 = por %p168, %p169
      %p171 = scmp.ne.s32.totalorder %s159, %s160
      %p172 = scmp.eq.s32.totalorder %s24, 1
      %p173 = por %p171, %p172
      %p175 = scmp.ne.s32.totalorder %s160, %s174
      %p176 = scmp.eq.s32.totalorder %s24, 0
      %p177 = por %p175, %p176
      %s178 = ssub.s32 %s18, %s25
      %p179 = scmp.eq.s32.totalorder %s178, 0
      %s181 = sadd.s32 %s180, 1
      %s182 = scalar_select %p179, %s180, %s181
      %p185 = pneg %p179
      %p186 = scmp.eq.s32.totalorder %s18, 1
      %p187 = por %p185, %p186
      %p188 = scmp.ne.s32.totalorder %s180, %s183
      %p189 = scmp.eq.s32.totalorder %s18, 0
      %p190 = por %p188, %p189
      %p191 = scmp.ne.s32.totalorder %s180, %s183
      %p192 = scmp.eq.s32.totalorder %s23, 1
      %p193 = por %p191, %p192
      %p194 = scmp.ne.s32.totalorder %s183, %s184
      %p195 = scmp.eq.s32.totalorder %s23, 0
      %p196 = por %p194, %p195
      %p197 = scmp.ne.s32.totalorder %s183, %s184
      %p198 = scmp.eq.s32.totalorder %s24, 1
      %p199 = por %p197, %p198
      %p201 = scmp.ne.s32.totalorder %s184, %s200
      %p202 = scmp.eq.s32.totalorder %s24, 0
      %p203 = por %p201, %p202
      %p204 = scmp.le.s32.totalorder 1, %s18
      %p205 = scmp.lt.s32.totalorder %s18, 3
      %p206 = pnand %p204, %p205
      %p207 = pneg %p206
      // Predicated region
      $region9: #{tpu_custom_call.1} parent=5 // pred_check
        _
      $region10: #{tpu_custom_call.1} parent=5 // pred_check_branch
        %209 = sbr.rel (%p206) target = $region12
      $region11: #{tpu_custom_call.1} parent=5 // pred_region
        %s210 = ssub.s32 %s18, 1
        // Predicated region
        $region13: #{tpu_custom_call.1} parent=11 // pred_check
          %p211 = pneg %p65
        $region14: #{tpu_custom_call.1} parent=11 // pred_check_branch
          %213 = sbr.rel (%p211) target = $region16
        $region15: #{tpu_custom_call.1} parent=11 // pred_region
          _
        $region16: #{tpu_custom_call.1} parent=11 // pred_fallthru
          _
        // Predicated region
        $region17: #{tpu_custom_call.1} parent=11 // pred_check
          %p214 = pneg %p86
        $region18: #{tpu_custom_call.1} parent=11 // pred_check_branch
          %216 = sbr.rel (%p214) target = $region20
        $region19: #{tpu_custom_call.1} parent=11 // pred_region
          _
        $region20: #{tpu_custom_call.1} parent=11 // pred_fallthru
          _
        // Predicated region
        $region21: #{tpu_custom_call.1} parent=11 // pred_check
          %p217 = pneg %p107
        $region22: #{tpu_custom_call.1} parent=11 // pred_check_branch
          %219 = sbr.rel (%p217) target = $region24
        $region23: #{tpu_custom_call.1} parent=11 // pred_region
          _
        $region24: #{tpu_custom_call.1} parent=11 // pred_fallthru
          _
        // Predicated region
        $region25: #{tpu_custom_call.1} parent=11 // pred_check
          %p220 = pneg %p128
        $region26: #{tpu_custom_call.1} parent=11 // pred_check_branch
          %222 = sbr.rel (%p220) target = $region28
        $region27: #{tpu_custom_call.1} parent=11 // pred_region
          _
        $region28: #{tpu_custom_call.1} parent=11 // pred_fallthru
          _
        // Predicated region
        $region29: #{tpu_custom_call.1} parent=11 // pred_check
          %p223 = pneg %p149
        $region30: #{tpu_custom_call.1} parent=11 // pred_check_branch
          %225 = sbr.rel (%p223) target = $region32
        $region31: #{tpu_custom_call.1} parent=11 // pred_region
          _
        $region32: #{tpu_custom_call.1} parent=11 // pred_fallthru
          _
        // Predicated region
        $region33: #{tpu_custom_call.1} parent=11 // pred_check
          %p226 = pneg %p170
        $region34: #{tpu_custom_call.1} parent=11 // pred_check_branch
          %228 = sbr.rel (%p226) target = $region36
        $region35: #{tpu_custom_call.1} parent=11 // pred_region
          _
        $region36: #{tpu_custom_call.1} parent=11 // pred_fallthru
          _
      $region12: #{tpu_custom_call.1} parent=5 // pred_fallthru
        _
      %p229 = scmp.lt.s32.totalorder %s18, 2
      // Predicated region
      $region37: #{tpu_custom_call.1} parent=5 // pred_check
        %p230 = pneg %p229
      $region38: #{tpu_custom_call.1} parent=5 // pred_check_branch
        %232 = sbr.rel (%p230) target = $region40
      $region39: #{tpu_custom_call.1} parent=5 // pred_region
        // Predicated region
        $region41: #{tpu_custom_call.1} parent=39 // pred_check
          %p233 = pneg %p38
        $region42: #{tpu_custom_call.1} parent=39 // pred_check_branch
          %235 = sbr.rel (%p233) target = $region44
        $region43: #{tpu_custom_call.1} parent=39 // pred_region
          %s236 = sand.u32 %s28, 1
          %s237 = sand.u32 %s28, 1
          %s238 = smul.addr %s237, 16
          %s239 = scalar_lea.vmem [#allocation3], %s238
          %s240 = smul.addr %s18, 8
          %s241 = scalar_lea.vmem %s0, %s240
          // Predicated region
          $region45: #{tpu_custom_call.1} parent=43 // pred_check
            _
          $region46: #{tpu_custom_call.1} parent=43 // pred_check_branch
            %243 = sbr.rel (0) target = $region48
          $region47: #{tpu_custom_call.1} parent=43 // pred_region
            // Predicated region
            $region49: #{tpu_custom_call.1} parent=47 // pred_check
              _
            $region50: #{tpu_custom_call.1} parent=47 // pred_check_branch
              %245 = sbr.rel (0) target = $region52
            $region51: #{tpu_custom_call.1} parent=47 // pred_region
              // Predicated region
              $region64: #{tpu_custom_call.1} parent=51 // pred_check
                _
              $region65: #{tpu_custom_call.1} parent=51 // pred_check_branch
                %262 = sbr.rel (0) target = $region67
              $region66: #{tpu_custom_call.1} parent=51 // pred_region
                loop: start=0, step=1, limit=1
                $region68: #{tpu_custom_call.1} parent=66 // loop_pre_header
                  _
                $region69: #{tpu_custom_call.1} parent=66 // loop_header
                  %s264 = sphi 0, %s268
                  %p265 = scmp.ge.s32.totalorder %s264, 1
                  %s269 = sphi %s241, %s241
                  %s270 = sphi %s239, %s239
                $region70: #{tpu_custom_call.1} parent=66 // loop_header_branch
                  %267 = sbr.rel (%p265) target = $region74
                $region71: #{tpu_custom_call.1} parent=66 // loop_body
                  %v271 = vld [vmem:[%s269] sm:$0xff]
                  %272 = vst [vmem:[%s270] sm:$0xff] %v271
                  %v273 = vld [vmem:[%s269 + $0x10] sm:$0xff]
                  %274 = vst [vmem:[%s270 + $0x8] sm:$0xff] %v273
                $region72: #{tpu_custom_call.1} parent=66 // loop_footer
                  %s268 = sadd.s32 1, %s264
                $region73: #{tpu_custom_call.1} parent=66 // loop_footer_branch
                  %263 = sbr.rel target = $region69
                $region74: #{tpu_custom_call.1} parent=66 // loop_exit
                  _
              $region67: #{tpu_custom_call.1} parent=51 // pred_fallthru
                _
              // Predicated region
              $region75: #{tpu_custom_call.1} parent=51 // pred_check
                _
              $region76: #{tpu_custom_call.1} parent=51 // pred_check_branch
                %276 = sbr.rel target = $region78
              $region77: #{tpu_custom_call.1} parent=51 // pred_region
                _
              $region78: #{tpu_custom_call.1} parent=51 // pred_fallthru
                _
            $region52: #{tpu_custom_call.1} parent=47 // pred_fallthru
              _
            // Predicated region
            $region53: #{tpu_custom_call.1} parent=47 // pred_check
              _
            $region54: #{tpu_custom_call.1} parent=47 // pred_check_branch
              %247 = sbr.rel target = $region56
            $region55: #{tpu_custom_call.1} parent=47 // pred_region
              loop: start=0, step=1, limit=1
              $region57: #{tpu_custom_call.1} parent=55 // loop_pre_header
                _
              $region58: #{tpu_custom_call.1} parent=55 // loop_header
                %s250 = sphi 0, %s254
                %p251 = scmp.ge.s32.totalorder %s250, 1
                %s255 = sphi %s241, %s241
                %s256 = sphi %s239, %s239
              $region59: #{tpu_custom_call.1} parent=55 // loop_header_branch
                %253 = sbr.rel (%p251) target = $region63
              $region60: #{tpu_custom_call.1} parent=55 // loop_body
                %v257 = vld [vmem:[%s255] sm:$0xff]
                %258 = vst [vmem:[%s256] sm:$0xff] %v257
                %v259 = vld [vmem:[%s255 + $0x10] sm:$0xff]
                %260 = vst [vmem:[%s256 + $0x8] sm:$0xff] %v259
              $region61: #{tpu_custom_call.1} parent=55 // loop_footer
                %s254 = sadd.s32 1, %s250
              $region62: #{tpu_custom_call.1} parent=55 // loop_footer_branch
                %249 = sbr.rel target = $region58
              $region63: #{tpu_custom_call.1} parent=55 // loop_exit
                _
            $region56: #{tpu_custom_call.1} parent=47 // pred_fallthru
              _
          $region48: #{tpu_custom_call.1} parent=43 // pred_fallthru
            _
          %277 = vnop
        $region44: #{tpu_custom_call.1} parent=39 // pred_fallthru
          _
      $region40: #{tpu_custom_call.1} parent=5 // pred_fallthru
        _
      %p278 = scmp.le.s32.totalorder 1, %s18
      %p279 = scmp.lt.s32.totalorder %s18, 3
      %p280 = pnand %p278, %p279
      %p281 = pneg %p280
      // Predicated region
      $region79: #{tpu_custom_call.1} parent=5 // pred_check
        _
      $region80: #{tpu_custom_call.1} parent=5 // pred_check_branch
        %283 = sbr.rel (%p280) target = $region82
      $region81: #{tpu_custom_call.1} parent=5 // pred_region
        %s284 = ssub.s32 %s18, 1
        %s285 = sand.u32 %s31, 1
        %s286 = sand.u32 %s31, 1
        %s287 = smul.addr %s286, 16
        %s288 = scalar_lea.vmem [#allocation3], %s287
        // Predicated region
        $region83: #{tpu_custom_call.1} parent=81 // pred_check
          %p289 = pneg %p44
        $region84: #{tpu_custom_call.1} parent=81 // pred_check_branch
          %291 = sbr.rel (%p289) target = $region86
        $region85: #{tpu_custom_call.1} parent=81 // pred_region
          _
        $region86: #{tpu_custom_call.1} parent=81 // pred_fallthru
          _
        %s292 = sand.u32 %s31, 1
        %s293 = sand.u32 %s31, 1
        %s294 = smul.addr %s293, 16
        %s295 = scalar_lea.vmem [#allocation3], %s294
        %p296 = pneg %p44
        %p297 = pneg %p41
        %p298 = pneg %p65
        %p299 = pneg %p62
        %p300 = pneg %p86
        %p301 = pneg %p83
        %p302 = pneg %p107
        %p303 = pneg %p104
        %p304 = pneg %p128
        %p305 = pneg %p125
        %p306 = pneg %p149
        %p307 = pneg %p146
        %p308 = pneg %p170
        %p309 = pneg %p167
        %p310 = pneg %p196
        %p311 = pneg %p193
        %s312 = sand.u32 %s183, 1
        %s313 = scalar_lea.sflag [#allocation5], %s312
        %s314 = sand.u32 %s183, 1
        %s315 = smul.addr %s314, 8
        %s316 = scalar_lea.vmem [#allocation4], %s315
        %v318 = vld [vmem:[%s288] sm:$0xff]
        %v319 = vld [vmem:[%s288 + $0x8] sm:$0xff]
        %v321 = vcombine.high %v318, %v318
        %v323 = vunpack.c.l.s4 1966171168
        %v324 = vunpack.c.0.s8 %v323
        %v325 = vlaneseq
        %v326 = vshrl.u32 %v325, 7
        %v327 = vsub.s32 %v324, %v326
        %v328 = vrot.slane %v318, %v327
        %v330 = vunpack.c.l.s4 1966171168
        %v331 = vunpack.c.0.s8 %v330
        %v332 = vlaneseq
        %v333 = vshrl.u32 %v332, 7
        %v334 = vsub.s32 %v331, %v333
        %v335 = vrot.slane %v321, %v334
        %v336 = vcombine.high %v328, %v328
        %v337 = vcombine.high %v335, %v335
        %v339 = vunpack.c.l.s4 1966171168
        %v340 = vunpack.c.0.s8 %v339
        %v341 = vlaneseq
        %v342 = vshrl.u32 %v341, 7
        %v343 = vsub.s32 %v340, %v342
        %v344 = vrot.slane %v328, %v343
        %v346 = vunpack.c.l.s4 1966171168
        %v347 = vunpack.c.0.s8 %v346
        %v348 = vlaneseq
        %v349 = vshrl.u32 %v348, 7
        %v350 = vsub.s32 %v347, %v349
        %v351 = vrot.slane %v335, %v350
        %v353 = vunpack.c.l.s4 1966171168
        %v354 = vunpack.c.0.s8 %v353
        %v355 = vlaneseq
        %v356 = vshrl.u32 %v355, 7
        %v357 = vsub.s32 %v354, %v356
        %v358 = vrot.slane %v336, %v357
        %v360 = vunpack.c.l.s4 1966171168
        %v361 = vunpack.c.0.s8 %v360
        %v362 = vlaneseq
        %v363 = vshrl.u32 %v362, 7
        %v364 = vsub.s32 %v361, %v363
        %v365 = vrot.slane %v337, %v364
        %v366 = vcombine.high %v344, %v344
        %v367 = vcombine.high %v351, %v351
        %v368 = vcombine.high %v358, %v358
        %v369 = vcombine.high %v365, %v365
        %v371 = vcombine.high %v319, %v319
        %v373 = vunpack.c.l.s4 1966171168
        %v374 = vunpack.c.0.s8 %v373
        %v375 = vlaneseq
        %v376 = vshrl.u32 %v375, 7
        %v377 = vsub.s32 %v374, %v376
        %v378 = vrot.slane %v319, %v377
        %v380 = vunpack.c.l.s4 1966171168
        %v381 = vunpack.c.0.s8 %v380
        %v382 = vlaneseq
        %v383 = vshrl.u32 %v382, 7
        %v384 = vsub.s32 %v381, %v383
        %v385 = vrot.slane %v371, %v384
        %v386 = vcombine.high %v378, %v378
        %v387 = vcombine.high %v385, %v385
        %v389 = vunpack.c.l.s4 1966171168
        %v390 = vunpack.c.0.s8 %v389
        %v391 = vlaneseq
        %v392 = vshrl.u32 %v391, 7
        %v393 = vsub.s32 %v390, %v392
        %v394 = vrot.slane %v378, %v393
        %v396 = vunpack.c.l.s4 1966171168
        %v397 = vunpack.c.0.s8 %v396
        %v398 = vlaneseq
        %v399 = vshrl.u32 %v398, 7
        %v400 = vsub.s32 %v397, %v399
        %v401 = vrot.slane %v385, %v400
        %v403 = vunpack.c.l.s4 1966171168
        %v404 = vunpack.c.0.s8 %v403
        %v405 = vlaneseq
        %v406 = vshrl.u32 %v405, 7
        %v407 = vsub.s32 %v404, %v406
        %v408 = vrot.slane %v386, %v407
        %v410 = vunpack.c.l.s4 1966171168
        %v411 = vunpack.c.0.s8 %v410
        %v412 = vlaneseq
        %v413 = vshrl.u32 %v412, 7
        %v414 = vsub.s32 %v411, %v413
        %v415 = vrot.slane %v387, %v414
        %v416 = vcombine.high %v394, %v394
        %v417 = vcombine.high %v401, %v401
        %v418 = vcombine.high %v408, %v408
        %v419 = vcombine.high %v415, %v415
        %v420 = vld [vmem:[%s1] sm:$0xff]
        %v421 = vld [vmem:[%s1 + $0x8] sm:$0xff]
        %v422 = vld [vmem:[%s1 + $0x10] sm:$0xff]
        %v423 = vld [vmem:[%s1 + $0x18] sm:$0xff]
        %v424 = vld [vmem:[%s2] sm:$0xff]
        %v425 = vld [vmem:[%s2 + $0x8] sm:$0xff]
        %v426 = vld [vmem:[%s2 + $0x10] sm:$0xff]
        %v427 = vld [vmem:[%s2 + $0x18] sm:$0xff]
        %429 = vset.pattern.permute.xlu0 0
        %430 = vperm.xlu0 %429, %v420
        %v431 = vpop.permute.xlu0 %430
        %434 = vset.pattern.permute.xlu0 0
        %435 = vperm.xlu0 %434, %v421
        %v436 = vpop.permute.xlu0 %435
        %439 = vset.pattern.permute.xlu0 0
        %440 = vperm.xlu0 %439, %v422
        %v441 = vpop.permute.xlu0 %440
        %444 = vset.pattern.permute.xlu0 0
        %445 = vperm.xlu0 %444, %v423
        %v446 = vpop.permute.xlu0 %445
        %v448 = vlaneseq
        %v449 = vshrl.u32 %v448, 7
        %v450 = vsub.s32 0, %v449
        %v451 = vrot.slane %v344, %v450
        %v452 = vlaneseq
        %v453 = vshrl.u32 %v452, 7
        %v454 = vsub.s32 0, %v453
        %v455 = vrot.slane %v358, %v454
        %v456 = vlaneseq
        %v457 = vshrl.u32 %v456, 7
        %v458 = vsub.s32 0, %v457
        %v459 = vrot.slane %v366, %v458
        %v460 = vlaneseq
        %v461 = vshrl.u32 %v460, 7
        %v462 = vsub.s32 0, %v461
        %v463 = vrot.slane %v368, %v462
        %v464 = vlaneseq
        %v465 = vshrl.u32 %v464, 7
        %v466 = vsub.s32 0, %v465
        %v467 = vrot.slane %v351, %v466
        %v468 = vlaneseq
        %v469 = vshrl.u32 %v468, 7
        %v470 = vsub.s32 0, %v469
        %v471 = vrot.slane %v365, %v470
        %v472 = vlaneseq
        %v473 = vshrl.u32 %v472, 7
        %v474 = vsub.s32 0, %v473
        %v475 = vrot.slane %v367, %v474
        %v476 = vlaneseq
        %v477 = vshrl.u32 %v476, 7
        %v478 = vsub.s32 0, %v477
        %v479 = vrot.slane %v369, %v478
        %v488 = vmul.f32 %v431, %v451
        %v489 = vmul.f32 %v436, %v451
        %v490 = vmul.f32 %v441, %v451
        %v491 = vmul.f32 %v446, %v451
        %v492 = vmul.f32 %v431, %v455
        %v493 = vmul.f32 %v436, %v455
        %v494 = vmul.f32 %v441, %v455
        %v495 = vmul.f32 %v446, %v455
        %v496 = vmul.f32 %v431, %v459
        %v497 = vmul.f32 %v436, %v459
        %v498 = vmul.f32 %v441, %v459
        %v499 = vmul.f32 %v446, %v459
        %v500 = vmul.f32 %v431, %v463
        %v501 = vmul.f32 %v436, %v463
        %v502 = vmul.f32 %v441, %v463
        %v503 = vmul.f32 %v446, %v463
        %v504 = vmul.f32 %v431, %v467
        %v505 = vmul.f32 %v436, %v467
        %v506 = vmul.f32 %v441, %v467
        %v507 = vmul.f32 %v446, %v467
        %v508 = vmul.f32 %v431, %v471
        %v509 = vmul.f32 %v436, %v471
        %v510 = vmul.f32 %v441, %v471
        %v511 = vmul.f32 %v446, %v471
        %v512 = vmul.f32 %v431, %v475
        %v513 = vmul.f32 %v436, %v475
        %v514 = vmul.f32 %v441, %v475
        %v515 = vmul.f32 %v446, %v475
        %v516 = vmul.f32 %v431, %v479
        %v517 = vmul.f32 %v436, %v479
        %v518 = vmul.f32 %v441, %v479
        %v519 = vmul.f32 %v446, %v479
        %520 = vset.pattern.permute.xlu0 1
        %521 = vperm.xlu0 %520, %v420
        %v522 = vpop.permute.xlu0 %521
        %524 = vset.pattern.permute.xlu0 1
        %525 = vperm.xlu0 %524, %v421
        %v526 = vpop.permute.xlu0 %525
        %528 = vset.pattern.permute.xlu0 1
        %529 = vperm.xlu0 %528, %v422
        %v530 = vpop.permute.xlu0 %529
        %532 = vset.pattern.permute.xlu0 1
        %533 = vperm.xlu0 %532, %v423
        %v534 = vpop.permute.xlu0 %533
        %v536 = vlaneseq
        %v537 = vshrl.u32 %v536, 7
        %v538 = vsub.s32 0, %v537
        %v539 = vrot.slane %v394, %v538
        %v540 = vlaneseq
        %v541 = vshrl.u32 %v540, 7
        %v542 = vsub.s32 0, %v541
        %v543 = vrot.slane %v408, %v542
        %v544 = vlaneseq
        %v545 = vshrl.u32 %v544, 7
        %v546 = vsub.s32 0, %v545
        %v547 = vrot.slane %v416, %v546
        %v548 = vlaneseq
        %v549 = vshrl.u32 %v548, 7
        %v550 = vsub.s32 0, %v549
        %v551 = vrot.slane %v418, %v550
        %v552 = vlaneseq
        %v553 = vshrl.u32 %v552, 7
        %v554 = vsub.s32 0, %v553
        %v555 = vrot.slane %v401, %v554
        %v556 = vlaneseq
        %v557 = vshrl.u32 %v556, 7
        %v558 = vsub.s32 0, %v557
        %v559 = vrot.slane %v415, %v558
        %v560 = vlaneseq
        %v561 = vshrl.u32 %v560, 7
        %v562 = vsub.s32 0, %v561
        %v563 = vrot.slane %v417, %v562
        %v564 = vlaneseq
        %v565 = vshrl.u32 %v564, 7
        %v566 = vsub.s32 0, %v565
        %v567 = vrot.slane %v419, %v566
        %v576 = vmul.f32 %v522, %v539
        %v577 = vmul.f32 %v526, %v539
        %v578 = vmul.f32 %v530, %v539
        %v579 = vmul.f32 %v534, %v539
        %v580 = vmul.f32 %v522, %v543
        %v581 = vmul.f32 %v526, %v543
        %v582 = vmul.f32 %v530, %v543
        %v583 = vmul.f32 %v534, %v543
        %v584 = vmul.f32 %v522, %v547
        %v585 = vmul.f32 %v526, %v547
        %v586 = vmul.f32 %v530, %v547
        %v587 = vmul.f32 %v534, %v547
        %v588 = vmul.f32 %v522, %v551
        %v589 = vmul.f32 %v526, %v551
        %v590 = vmul.f32 %v530, %v551
        %v591 = vmul.f32 %v534, %v551
        %v592 = vmul.f32 %v522, %v555
        %v593 = vmul.f32 %v526, %v555
        %v594 = vmul.f32 %v530, %v555
        %v595 = vmul.f32 %v534, %v555
        %v596 = vmul.f32 %v522, %v559
        %v597 = vmul.f32 %v526, %v559
        %v598 = vmul.f32 %v530, %v559
        %v599 = vmul.f32 %v534, %v559
        %v600 = vmul.f32 %v522, %v563
        %v601 = vmul.f32 %v526, %v563
        %v602 = vmul.f32 %v530, %v563
        %v603 = vmul.f32 %v534, %v563
        %v604 = vmul.f32 %v522, %v567
        %v605 = vmul.f32 %v526, %v567
        %v606 = vmul.f32 %v530, %v567
        %v607 = vmul.f32 %v534, %v567
        %v608 = vadd.f32 %v488, %v576
        %v609 = vadd.f32 %v489, %v577
        %v610 = vadd.f32 %v490, %v578
        %v611 = vadd.f32 %v491, %v579
        %v612 = vadd.f32 %v492, %v580
        %v613 = vadd.f32 %v493, %v581
        %v614 = vadd.f32 %v494, %v582
        %v615 = vadd.f32 %v495, %v583
        %v616 = vadd.f32 %v496, %v584
        %v617 = vadd.f32 %v497, %v585
        %v618 = vadd.f32 %v498, %v586
        %v619 = vadd.f32 %v499, %v587
        %v620 = vadd.f32 %v500, %v588
        %v621 = vadd.f32 %v501, %v589
        %v622 = vadd.f32 %v502, %v590
        %v623 = vadd.f32 %v503, %v591
        %v624 = vadd.f32 %v504, %v592
        %v625 = vadd.f32 %v505, %v593
        %v626 = vadd.f32 %v506, %v594
        %v627 = vadd.f32 %v507, %v595
        %v628 = vadd.f32 %v508, %v596
        %v629 = vadd.f32 %v509, %v597
        %v630 = vadd.f32 %v510, %v598
        %v631 = vadd.f32 %v511, %v599
        %v632 = vadd.f32 %v512, %v600
        %v633 = vadd.f32 %v513, %v601
        %v634 = vadd.f32 %v514, %v602
        %v635 = vadd.f32 %v515, %v603
        %v636 = vadd.f32 %v516, %v604
        %v637 = vadd.f32 %v517, %v605
        %v638 = vadd.f32 %v518, %v606
        %v639 = vadd.f32 %v519, %v607
        %641 = vset.pattern.permute.xlu0 0
        %642 = vperm.xlu0 %641, %v424
        %v643 = vpop.permute.xlu0 %642
        %646 = vset.pattern.permute.xlu0 0
        %647 = vperm.xlu0 %646, %v425
        %v648 = vpop.permute.xlu0 %647
        %651 = vset.pattern.permute.xlu0 0
        %652 = vperm.xlu0 %651, %v426
        %v653 = vpop.permute.xlu0 %652
        %656 = vset.pattern.permute.xlu0 0
        %657 = vperm.xlu0 %656, %v427
        %v658 = vpop.permute.xlu0 %657
        %v660 = vadd.f32 %v608, %v643
        %v661 = vadd.f32 %v609, %v648
        %v662 = vadd.f32 %v610, %v653
        %v663 = vadd.f32 %v611, %v658
        %v664 = vadd.f32 %v612, %v643
        %v665 = vadd.f32 %v613, %v648
        %v666 = vadd.f32 %v614, %v653
        %v667 = vadd.f32 %v615, %v658
        %v668 = vadd.f32 %v616, %v643
        %v669 = vadd.f32 %v617, %v648
        %v670 = vadd.f32 %v618, %v653
        %v671 = vadd.f32 %v619, %v658
        %v672 = vadd.f32 %v620, %v643
        %v673 = vadd.f32 %v621, %v648
        %v674 = vadd.f32 %v622, %v653
        %v675 = vadd.f32 %v623, %v658
        %v676 = vadd.f32 %v624, %v643
        %v677 = vadd.f32 %v625, %v648
        %v678 = vadd.f32 %v626, %v653
        %v679 = vadd.f32 %v627, %v658
        %v680 = vadd.f32 %v628, %v643
        %v681 = vadd.f32 %v629, %v648
        %v682 = vadd.f32 %v630, %v653
        %v683 = vadd.f32 %v631, %v658
        %v684 = vadd.f32 %v632, %v643
        %v685 = vadd.f32 %v633, %v648
        %v686 = vadd.f32 %v634, %v653
        %v687 = vadd.f32 %v635, %v658
        %v688 = vadd.f32 %v636, %v643
        %v689 = vadd.f32 %v637, %v648
        %v690 = vadd.f32 %v638, %v653
        %v691 = vadd.f32 %v639, %v658
        %v692 = vtanh.pop %v660
        %v693 = vtanh.pop %v661
        %v694 = vtanh.pop %v662
        %v695 = vtanh.pop %v663
        %v696 = vtanh.pop %v664
        %v697 = vtanh.pop %v665
        %v698 = vtanh.pop %v666
        %v699 = vtanh.pop %v667
        %v700 = vtanh.pop %v668
        %v701 = vtanh.pop %v669
        %v702 = vtanh.pop %v670
        %v703 = vtanh.pop %v671
        %v704 = vtanh.pop %v672
        %v705 = vtanh.pop %v673
        %v706 = vtanh.pop %v674
        %v707 = vtanh.pop %v675
        %v708 = vtanh.pop %v676
        %v709 = vtanh.pop %v677
        %v710 = vtanh.pop %v678
        %v711 = vtanh.pop %v679
        %v712 = vtanh.pop %v680
        %v713 = vtanh.pop %v681
        %v714 = vtanh.pop %v682
        %v715 = vtanh.pop %v683
        %v716 = vtanh.pop %v684
        %v717 = vtanh.pop %v685
        %v718 = vtanh.pop %v686
        %v719 = vtanh.pop %v687
        %v720 = vtanh.pop %v688
        %v721 = vtanh.pop %v689
        %v722 = vtanh.pop %v690
        %v723 = vtanh.pop %v691
        %v724 = vld [vmem:[%s3] sm:$0xff]
        %v725 = vld [vmem:[%s3 + $0x8] sm:$0xff]
        %v726 = vld [vmem:[%s3 + $0x10] sm:$0xff]
        %v727 = vld [vmem:[%s3 + $0x18] sm:$0xff]
        %v728 = vld [vmem:[%s3 + $0x20] sm:$0xff]
        %v729 = vld [vmem:[%s3 + $0x28] sm:$0xff]
        %v730 = vld [vmem:[%s3 + $0x30] sm:$0xff]
        %v731 = vld [vmem:[%s3 + $0x38] sm:$0xff]
        %v732 = vld [vmem:[%s3 + $0x40] sm:$0xff]
        %v733 = vld [vmem:[%s3 + $0x48] sm:$0xff]
        %v734 = vld [vmem:[%s3 + $0x50] sm:$0xff]
        %v735 = vld [vmem:[%s3 + $0x58] sm:$0xff]
        %v736 = vld [vmem:[%s3 + $0x60] sm:$0xff]
        %v737 = vld [vmem:[%s3 + $0x68] sm:$0xff]
        %v738 = vld [vmem:[%s3 + $0x70] sm:$0xff]
        %v739 = vld [vmem:[%s3 + $0x78] sm:$0xff]
        %v740 = vld [vmem:[%s3 + $0x80] sm:$0xff]
        %v741 = vld [vmem:[%s3 + $0x88] sm:$0xff]
        %v742 = vld [vmem:[%s3 + $0x90] sm:$0xff]
        %v743 = vld [vmem:[%s3 + $0x98] sm:$0xff]
        %v744 = vld [vmem:[%s3 + $0xa0] sm:$0xff]
        %v745 = vld [vmem:[%s3 + $0xa8] sm:$0xff]
        %v746 = vld [vmem:[%s3 + $0xb0] sm:$0xff]
        %v747 = vld [vmem:[%s3 + $0xb8] sm:$0xff]
        %v748 = vld [vmem:[%s3 + $0xc0] sm:$0xff]
        %v749 = vld [vmem:[%s3 + $0xc8] sm:$0xff]
        %v750 = vld [vmem:[%s3 + $0xd0] sm:$0xff]
        %v751 = vld [vmem:[%s3 + $0xd8] sm:$0xff]
        %v752 = vld [vmem:[%s3 + $0xe0] sm:$0xff]
        %v753 = vld [vmem:[%s3 + $0xe8] sm:$0xff]
        %v754 = vld [vmem:[%s3 + $0xf0] sm:$0xff]
        %v755 = vld [vmem:[%s3 + $0xf8] sm:$0xff]
        %v756 = vpack.c.bf16 %v693, %v692
        %v757 = vpack.c.bf16 %v695, %v694
        %v758 = vpack.c.bf16 %v697, %v696
        %v759 = vpack.c.bf16 %v699, %v698
        %v760 = vpack.c.bf16 %v701, %v700
        %v761 = vpack.c.bf16 %v703, %v702
        %v762 = vpack.c.bf16 %v705, %v704
        %v763 = vpack.c.bf16 %v707, %v706
        %v764 = vpack.c.bf16 %v709, %v708
        %v765 = vpack.c.bf16 %v711, %v710
        %v766 = vpack.c.bf16 %v713, %v712
        %v767 = vpack.c.bf16 %v715, %v714
        %v768 = vpack.c.bf16 %v717, %v716
        %v769 = vpack.c.bf16 %v719, %v718
        %v770 = vpack.c.bf16 %v721, %v720
        %v771 = vpack.c.bf16 %v723, %v722
        %v772 = vld [vmem:[%s4] sm:$0xff]
        %v773 = vld [vmem:[%s4 + $0x8] sm:$0xff]
        %v774 = vld [vmem:[%s4 + $0x10] sm:$0xff]
        %v775 = vld [vmem:[%s4 + $0x18] sm:$0xff]
        %v776 = vld [vmem:[%s4 + $0x20] sm:$0xff]
        %v777 = vld [vmem:[%s4 + $0x28] sm:$0xff]
        %v778 = vld [vmem:[%s4 + $0x30] sm:$0xff]
        %v779 = vld [vmem:[%s4 + $0x38] sm:$0xff]
        %v780 = vld [vmem:[%s4 + $0x40] sm:$0xff]
        %v781 = vld [vmem:[%s4 + $0x48] sm:$0xff]
        %v782 = vld [vmem:[%s4 + $0x50] sm:$0xff]
        %v783 = vld [vmem:[%s4 + $0x58] sm:$0xff]
        %v784 = vld [vmem:[%s4 + $0x60] sm:$0xff]
        %v785 = vld [vmem:[%s4 + $0x68] sm:$0xff]
        %v786 = vld [vmem:[%s4 + $0x70] sm:$0xff]
        %v787 = vld [vmem:[%s4 + $0x78] sm:$0xff]
        %v788 = vld [vmem:[%s4 + $0x80] sm:$0xff]
        %v789 = vld [vmem:[%s4 + $0x88] sm:$0xff]
        %v790 = vld [vmem:[%s4 + $0x90] sm:$0xff]
        %v791 = vld [vmem:[%s4 + $0x98] sm:$0xff]
        %v792 = vld [vmem:[%s4 + $0xa0] sm:$0xff]
        %v793 = vld [vmem:[%s4 + $0xa8] sm:$0xff]
        %v794 = vld [vmem:[%s4 + $0xb0] sm:$0xff]
        %v795 = vld [vmem:[%s4 + $0xb8] sm:$0xff]
        %v796 = vld [vmem:[%s4 + $0xc0] sm:$0xff]
        %v797 = vld [vmem:[%s4 + $0xc8] sm:$0xff]
        %v798 = vld [vmem:[%s4 + $0xd0] sm:$0xff]
        %v799 = vld [vmem:[%s4 + $0xd8] sm:$0xff]
        %v800 = vld [vmem:[%s4 + $0xe0] sm:$0xff]
        %v801 = vld [vmem:[%s4 + $0xe8] sm:$0xff]
        %v802 = vld [vmem:[%s4 + $0xf0] sm:$0xff]
        %v803 = vld [vmem:[%s4 + $0xf8] sm:$0xff]
        %805 = vset.pattern.permute.xlu0 0
        %806 = vperm.xlu0 %805, %v772
        %v807 = vpop.permute.xlu0 %806
        %810 = vset.pattern.permute.xlu0 0
        %811 = vperm.xlu0 %810, %v773
        %v812 = vpop.permute.xlu0 %811
        %815 = vset.pattern.permute.xlu0 0
        %816 = vperm.xlu0 %815, %v774
        %v817 = vpop.permute.xlu0 %816
        %820 = vset.pattern.permute.xlu0 0
        %821 = vperm.xlu0 %820, %v775
        %v822 = vpop.permute.xlu0 %821
        %825 = vset.pattern.permute.xlu0 0
        %826 = vperm.xlu0 %825, %v776
        %v827 = vpop.permute.xlu0 %826
        %830 = vset.pattern.permute.xlu0 0
        %831 = vperm.xlu0 %830, %v777
        %v832 = vpop.permute.xlu0 %831
        %835 = vset.pattern.permute.xlu0 0
        %836 = vperm.xlu0 %835, %v778
        %v837 = vpop.permute.xlu0 %836
        %840 = vset.pattern.permute.xlu0 0
        %841 = vperm.xlu0 %840, %v779
        %v842 = vpop.permute.xlu0 %841
        %845 = vset.pattern.permute.xlu0 0
        %846 = vperm.xlu0 %845, %v780
        %v847 = vpop.permute.xlu0 %846
        %850 = vset.pattern.permute.xlu0 0
        %851 = vperm.xlu0 %850, %v781
        %v852 = vpop.permute.xlu0 %851
        %855 = vset.pattern.permute.xlu0 0
        %856 = vperm.xlu0 %855, %v782
        %v857 = vpop.permute.xlu0 %856
        %860 = vset.pattern.permute.xlu0 0
        %861 = vperm.xlu0 %860, %v783
        %v862 = vpop.permute.xlu0 %861
        %865 = vset.pattern.permute.xlu0 0
        %866 = vperm.xlu0 %865, %v784
        %v867 = vpop.permute.xlu0 %866
        %870 = vset.pattern.permute.xlu0 0
        %871 = vperm.xlu0 %870, %v785
        %v872 = vpop.permute.xlu0 %871
        %875 = vset.pattern.permute.xlu0 0
        %876 = vperm.xlu0 %875, %v786
        %v877 = vpop.permute.xlu0 %876
        %880 = vset.pattern.permute.xlu0 0
        %881 = vperm.xlu0 %880, %v787
        %v882 = vpop.permute.xlu0 %881
        %885 = vset.pattern.permute.xlu0 0
        %886 = vperm.xlu0 %885, %v788
        %v887 = vpop.permute.xlu0 %886
        %890 = vset.pattern.permute.xlu0 0
        %891 = vperm.xlu0 %890, %v789
        %v892 = vpop.permute.xlu0 %891
        %895 = vset.pattern.permute.xlu0 0
        %896 = vperm.xlu0 %895, %v790
        %v897 = vpop.permute.xlu0 %896
        %900 = vset.pattern.permute.xlu0 0
        %901 = vperm.xlu0 %900, %v791
        %v902 = vpop.permute.xlu0 %901
        %905 = vset.pattern.permute.xlu0 0
        %906 = vperm.xlu0 %905, %v792
        %v907 = vpop.permute.xlu0 %906
        %910 = vset.pattern.permute.xlu0 0
        %911 = vperm.xlu0 %910, %v793
        %v912 = vpop.permute.xlu0 %911
        %915 = vset.pattern.permute.xlu0 0
        %916 = vperm.xlu0 %915, %v794
        %v917 = vpop.permute.xlu0 %916
        %920 = vset.pattern.permute.xlu0 0
        %921 = vperm.xlu0 %920, %v795
        %v922 = vpop.permute.xlu0 %921
        %925 = vset.pattern.permute.xlu0 0
        %926 = vperm.xlu0 %925, %v796
        %v927 = vpop.permute.xlu0 %926
        %930 = vset.pattern.permute.xlu0 0
        %931 = vperm.xlu0 %930, %v797
        %v932 = vpop.permute.xlu0 %931
        %935 = vset.pattern.permute.xlu0 0
        %936 = vperm.xlu0 %935, %v798
        %v937 = vpop.permute.xlu0 %936
        %940 = vset.pattern.permute.xlu0 0
        %941 = vperm.xlu0 %940, %v799
        %v942 = vpop.permute.xlu0 %941
        %945 = vset.pattern.permute.xlu0 0
        %946 = vperm.xlu0 %945, %v800
        %v947 = vpop.permute.xlu0 %946
        %950 = vset.pattern.permute.xlu0 0
        %951 = vperm.xlu0 %950, %v801
        %v952 = vpop.permute.xlu0 %951
        %955 = vset.pattern.permute.xlu0 0
        %956 = vperm.xlu0 %955, %v802
        %v957 = vpop.permute.xlu0 %956
        %960 = vset.pattern.permute.xlu0 0
        %961 = vperm.xlu0 %960, %v803
        %v962 = vpop.permute.xlu0 %961
        %v996 = vunpack.c.l.b16 %v724
        %v997 = vunpack.c.h.b16 %v724
        %v998 = vunpack.c.l.b16 %v725
        %v999 = vunpack.c.h.b16 %v725
        %v1000 = vunpack.c.l.b16 %v726
        %v1001 = vunpack.c.h.b16 %v726
        %v1002 = vunpack.c.l.b16 %v727
        %v1003 = vunpack.c.h.b16 %v727
        %v1004 = vunpack.c.l.b16 %v728
        %v1005 = vunpack.c.h.b16 %v728
        %v1006 = vunpack.c.l.b16 %v729
        %v1007 = vunpack.c.h.b16 %v729
        %v1008 = vunpack.c.l.b16 %v730
        %v1009 = vunpack.c.h.b16 %v730
        %v1010 = vunpack.c.l.b16 %v731
        %v1011 = vunpack.c.h.b16 %v731
        %v1012 = vunpack.c.l.b16 %v732
        %v1013 = vunpack.c.h.b16 %v732
        %v1014 = vunpack.c.l.b16 %v733
        %v1015 = vunpack.c.h.b16 %v733
        %v1016 = vunpack.c.l.b16 %v734
        %v1017 = vunpack.c.h.b16 %v734
        %v1018 = vunpack.c.l.b16 %v735
        %v1019 = vunpack.c.h.b16 %v735
        %v1020 = vunpack.c.l.b16 %v736
        %v1021 = vunpack.c.h.b16 %v736
        %v1022 = vunpack.c.l.b16 %v737
        %v1023 = vunpack.c.h.b16 %v737
        %v1024 = vunpack.c.l.b16 %v738
        %v1025 = vunpack.c.h.b16 %v738
        %v1026 = vunpack.c.l.b16 %v739
        %v1027 = vunpack.c.h.b16 %v739
        %v1028 = vunpack.c.l.b16 %v740
        %v1029 = vunpack.c.h.b16 %v740
        %v1030 = vunpack.c.l.b16 %v741
        %v1031 = vunpack.c.h.b16 %v741
        %v1032 = vunpack.c.l.b16 %v742
        %v1033 = vunpack.c.h.b16 %v742
        %v1034 = vunpack.c.l.b16 %v743
        %v1035 = vunpack.c.h.b16 %v743
        %v1036 = vunpack.c.l.b16 %v744
        %v1037 = vunpack.c.h.b16 %v744
        %v1038 = vunpack.c.l.b16 %v745
        %v1039 = vunpack.c.h.b16 %v745
        %v1040 = vunpack.c.l.b16 %v746
        %v1041 = vunpack.c.h.b16 %v746
        %v1042 = vunpack.c.l.b16 %v747
        %v1043 = vunpack.c.h.b16 %v747
        %v1044 = vunpack.c.l.b16 %v748
        %v1045 = vunpack.c.h.b16 %v748
        %v1046 = vunpack.c.l.b16 %v749
        %v1047 = vunpack.c.h.b16 %v749
        %v1048 = vunpack.c.l.b16 %v750
        %v1049 = vunpack.c.h.b16 %v750
        %v1050 = vunpack.c.l.b16 %v751
        %v1051 = vunpack.c.h.b16 %v751
        %v1052 = vunpack.c.l.b16 %v752
        %v1053 = vunpack.c.h.b16 %v752
        %v1054 = vunpack.c.l.b16 %v753
        %v1055 = vunpack.c.h.b16 %v753
        %v1056 = vunpack.c.l.b16 %v754
        %v1057 = vunpack.c.h.b16 %v754
        %v1058 = vunpack.c.l.b16 %v755
        %v1059 = vunpack.c.h.b16 %v755
        %v1060 = vpack.c.b16 %v998, %v996
        %v1061 = vpack.c.b16 %v999, %v997
        %v1062 = vpack.c.b16 %v1002, %v1000
        %v1063 = vpack.c.b16 %v1003, %v1001
        %v1064 = vpack.c.b16 %v1006, %v1004
        %v1065 = vpack.c.b16 %v1007, %v1005
        %v1066 = vpack.c.b16 %v1010, %v1008
        %v1067 = vpack.c.b16 %v1011, %v1009
        %v1068 = vpack.c.b16 %v1014, %v1012
        %v1069 = vpack.c.b16 %v1015, %v1013
        %v1070 = vpack.c.b16 %v1018, %v1016
        %v1071 = vpack.c.b16 %v1019, %v1017
        %v1072 = vpack.c.b16 %v1022, %v1020
        %v1073 = vpack.c.b16 %v1023, %v1021
        %v1074 = vpack.c.b16 %v1026, %v1024
        %v1075 = vpack.c.b16 %v1027, %v1025
        %v1076 = vpack.c.b16 %v1030, %v1028
        %v1077 = vpack.c.b16 %v1031, %v1029
        %v1078 = vpack.c.b16 %v1034, %v1032
        %v1079 = vpack.c.b16 %v1035, %v1033
        %v1080 = vpack.c.b16 %v1038, %v1036
        %v1081 = vpack.c.b16 %v1039, %v1037
        %v1082 = vpack.c.b16 %v1042, %v1040
        %v1083 = vpack.c.b16 %v1043, %v1041
        %v1084 = vpack.c.b16 %v1046, %v1044
        %v1085 = vpack.c.b16 %v1047, %v1045
        %v1086 = vpack.c.b16 %v1050, %v1048
        %v1087 = vpack.c.b16 %v1051, %v1049
        %v1088 = vpack.c.b16 %v1054, %v1052
        %v1089 = vpack.c.b16 %v1055, %v1053
        %v1090 = vpack.c.b16 %v1058, %v1056
        %v1091 = vpack.c.b16 %v1059, %v1057
        %1124 = vmatprep.subr.bf16.mxu0 0
        %1125 = vmatpush1.bf16.msra.mxu0 %v756
        %1126 = vmatprep.subr.bf16.mxu0 0
        %1127 = vmatpush1.bf16.msra.mxu0 %v757
        %1128 = vmatprep.subr.bf16.mxu0 0
        %1129 = vmatpush1.bf16.msra.mxu0 %v758
        %1130 = vmatprep.subr.bf16.mxu0 0
        %1131 = vmatpush1.bf16.msra.mxu0 %v759
        %1132 = vmatprep.subr.bf16.mxu0 0
        %1133 = vmatpush1.bf16.msra.mxu0 %v760
        %1134 = vmatprep.subr.bf16.mxu0 0
        %1135 = vmatpush1.bf16.msra.mxu0 %v761
        %1136 = vmatprep.subr.bf16.mxu0 0
        %1137 = vmatpush1.bf16.msra.mxu0 %v762
        %1138 = vmatprep.subr.bf16.mxu0 0
        %1139 = vmatpush1.bf16.msra.mxu0 %v763
        %1140 = vmatprep.subr.bf16.mxu0 0
        %1141 = vmatpush1.bf16.msra.mxu0 %v764
        %1142 = vmatprep.subr.bf16.mxu0 0
        %1143 = vmatpush1.bf16.msra.mxu0 %v765
        %1144 = vmatprep.subr.bf16.mxu0 0
        %1145 = vmatpush1.bf16.msra.mxu0 %v766
        %1146 = vmatprep.subr.bf16.mxu0 0
        %1147 = vmatpush1.bf16.msra.mxu0 %v767
        %1148 = vmatprep.subr.bf16.mxu0 0
        %1149 = vmatpush1.bf16.msra.mxu0 %v768
        %1150 = vmatprep.subr.bf16.mxu0 0
        %1151 = vmatpush1.bf16.msra.mxu0 %v769
        %1152 = vmatprep.subr.bf16.mxu0 0
        %1153 = vmatpush1.bf16.msra.mxu0 %v770
        %1154 = vmatprep.subr.bf16.mxu0 0
        %1155 = vmatpush1.bf16.msra.mxu0 %v771
        %1156 = vmatprep.mubr.bf16.mxu0 %v1061
        %1157 = vmatmul.mubr.bf16.gmra.mrb[0].mxu0 %v1060
        %v1158 = vpop.f32.mrb[0].mxu0
        %v1159 = vadd.f32 %v807, %v1158
        %v1160 = vpop.f32.mrb[0].mxu0
        %v1161 = vpop.f32.mrb[0].mxu0
        %v1162 = vadd.f32 %v812, %v1161
        %v1163 = vpop.f32.mrb[0].mxu0
        %1164 = vmatprep.mubr.bf16.mxu0 %v1063
        %1165 = vmatmul.mubr.bf16.gmra.mrb[0].mxu0 %v1062
        %v1166 = vpop.f32.mrb[0].mxu0
        %v1167 = vadd.f32 %v817, %v1166
        %v1168 = vpop.f32.mrb[0].mxu0
        %v1169 = vpop.f32.mrb[0].mxu0
        %v1170 = vadd.f32 %v822, %v1169
        %v1171 = vpop.f32.mrb[0].mxu0
        %1172 = vmatprep.mubr.bf16.mxu0 %v1065
        %1173 = vmatmul.mubr.bf16.gmra.mrb[0].mxu0 %v1064
        %v1174 = vpop.f32.mrb[0].mxu0
        %v1175 = vadd.f32 %v827, %v1174
        %v1176 = vpop.f32.mrb[0].mxu0
        %v1177 = vpop.f32.mrb[0].mxu0
        %v1178 = vadd.f32 %v832, %v1177
        %v1179 = vpop.f32.mrb[0].mxu0
        %1180 = vmatprep.mubr.bf16.mxu0 %v1067
        %1181 = vmatmul.mubr.bf16.gmra.mrb[0].mxu0 %v1066
        %v1182 = vpop.f32.mrb[0].mxu0
        %v1183 = vadd.f32 %v837, %v1182
        %v1184 = vpop.f32.mrb[0].mxu0
        %v1185 = vpop.f32.mrb[0].mxu0
        %v1186 = vadd.f32 %v842, %v1185
        %v1187 = vpop.f32.mrb[0].mxu0
        %1188 = vmatprep.mubr.bf16.mxu0 %v1069
        %1189 = vmatmul.mubr.bf16.gmra.mrb[0].mxu0 %v1068
        %v1190 = vpop.f32.mrb[0].mxu0
        %v1191 = vadd.f32 %v847, %v1190
        %v1192 = vpop.f32.mrb[0].mxu0
        %v1193 = vpop.f32.mrb[0].mxu0
        %v1194 = vadd.f32 %v852, %v1193
        %v1195 = vpop.f32.mrb[0].mxu0
        %1196 = vmatprep.mubr.bf16.mxu0 %v1071
        %1197 = vmatmul.mubr.bf16.gmra.mrb[0].mxu0 %v1070
        %v1198 = vpop.f32.mrb[0].mxu0
        %v1199 = vadd.f32 %v857, %v1198
        %v1200 = vpop.f32.mrb[0].mxu0
        %v1201 = vpop.f32.mrb[0].mxu0
        %v1202 = vadd.f32 %v862, %v1201
        %v1203 = vpop.f32.mrb[0].mxu0
        %1204 = vmatprep.mubr.bf16.mxu0 %v1073
        %1205 = vmatmul.mubr.bf16.gmra.mrb[0].mxu0 %v1072
        %v1206 = vpop.f32.mrb[0].mxu0
        %v1207 = vadd.f32 %v867, %v1206
        %v1208 = vpop.f32.mrb[0].mxu0
        %v1209 = vpop.f32.mrb[0].mxu0
        %v1210 = vadd.f32 %v872, %v1209
        %v1211 = vpop.f32.mrb[0].mxu0
        %1212 = vmatprep.mubr.bf16.mxu0 %v1075
        %1213 = vmatmul.mubr.bf16.gmra.mrb[0].mxu0 %v1074
        %v1214 = vpop.f32.mrb[0].mxu0
        %v1215 = vadd.f32 %v877, %v1214
        %v1216 = vpop.f32.mrb[0].mxu0
        %v1217 = vpop.f32.mrb[0].mxu0
        %v1218 = vadd.f32 %v882, %v1217
        %v1219 = vpop.f32.mrb[0].mxu0
        %1220 = vmatprep.mubr.bf16.mxu0 %v1077
        %1221 = vmatmul.mubr.bf16.gmra.mrb[0].mxu0 %v1076
        %v1222 = vpop.f32.mrb[0].mxu0
        %v1223 = vadd.f32 %v887, %v1222
        %v1224 = vpop.f32.mrb[0].mxu0
        %v1225 = vpop.f32.mrb[0].mxu0
        %v1226 = vadd.f32 %v892, %v1225
        %v1227 = vpop.f32.mrb[0].mxu0
        %1228 = vmatprep.mubr.bf16.mxu0 %v1079
        %1229 = vmatmul.mubr.bf16.gmra.mrb[0].mxu0 %v1078
        %v1230 = vpop.f32.mrb[0].mxu0
        %v1231 = vadd.f32 %v897, %v1230
        %v1232 = vpop.f32.mrb[0].mxu0
        %v1233 = vpop.f32.mrb[0].mxu0
        %v1234 = vadd.f32 %v902, %v1233
        %v1235 = vpop.f32.mrb[0].mxu0
        %1236 = vmatprep.mubr.bf16.mxu0 %v1081
        %1237 = vmatmul.mubr.bf16.gmra.mrb[0].mxu0 %v1080
        %v1238 = vpop.f32.mrb[0].mxu0
        %v1239 = vadd.f32 %v907, %v1238
        %v1240 = vpop.f32.mrb[0].mxu0
        %v1241 = vpop.f32.mrb[0].mxu0
        %v1242 = vadd.f32 %v912, %v1241
        %v1243 = vpop.f32.mrb[0].mxu0
        %1244 = vmatprep.mubr.bf16.mxu0 %v1083
        %1245 = vmatmul.mubr.bf16.gmra.mrb[0].mxu0 %v1082
        %v1246 = vpop.f32.mrb[0].mxu0
        %v1247 = vadd.f32 %v917, %v1246
        %v1248 = vpop.f32.mrb[0].mxu0
        %v1249 = vpop.f32.mrb[0].mxu0
        %v1250 = vadd.f32 %v922, %v1249
        %v1251 = vpop.f32.mrb[0].mxu0
        %1252 = vmatprep.mubr.bf16.mxu0 %v1085
        %1253 = vmatmul.mubr.bf16.gmra.mrb[0].mxu0 %v1084
        %v1254 = vpop.f32.mrb[0].mxu0
        %v1255 = vadd.f32 %v927, %v1254
        %v1256 = vpop.f32.mrb[0].mxu0
        %v1257 = vpop.f32.mrb[0].mxu0
        %v1258 = vadd.f32 %v932, %v1257
        %v1259 = vpop.f32.mrb[0].mxu0
        %1260 = vmatprep.mubr.bf16.mxu0 %v1087
        %1261 = vmatmul.mubr.bf16.gmra.mrb[0].mxu0 %v1086
        %v1262 = vpop.f32.mrb[0].mxu0
        %v1263 = vadd.f32 %v937, %v1262
        %v1264 = vpop.f32.mrb[0].mxu0
        %v1265 = vpop.f32.mrb[0].mxu0
        %v1266 = vadd.f32 %v942, %v1265
        %v1267 = vpop.f32.mrb[0].mxu0
        %1268 = vmatprep.mubr.bf16.mxu0 %v1089
        %1269 = vmatmul.mubr.bf16.gmra.mrb[0].mxu0 %v1088
        %v1270 = vpop.f32.mrb[0].mxu0
        %v1271 = vadd.f32 %v947, %v1270
        %v1272 = vpop.f32.mrb[0].mxu0
        %v1273 = vpop.f32.mrb[0].mxu0
        %v1274 = vadd.f32 %v952, %v1273
        %v1275 = vpop.f32.mrb[0].mxu0
        %1276 = vmatprep.mubr.bf16.mxu0 %v1091
        %1277 = vmatmul.mubr.bf16.gmra.mrb[0].mxu0 %v1090
        %v1278 = vpop.f32.mrb[0].mxu0
        %v1279 = vadd.f32 %v957, %v1278
        %v1280 = vpop.f32.mrb[0].mxu0
        %v1281 = vpop.f32.mrb[0].mxu0
        %v1282 = vadd.f32 %v962, %v1281
        %v1283 = vpop.f32.mrb[0].mxu0
        %1284 = vdwg.mxu0
        %v1285 = vtanh.pop %v1159
        %v1286 = vtanh.pop %v1162
        %v1287 = vtanh.pop %v1167
        %v1288 = vtanh.pop %v1170
        %v1289 = vtanh.pop %v1175
        %v1290 = vtanh.pop %v1178
        %v1291 = vtanh.pop %v1183
        %v1292 = vtanh.pop %v1186
        %v1293 = vtanh.pop %v1191
        %v1294 = vtanh.pop %v1194
        %v1295 = vtanh.pop %v1199
        %v1296 = vtanh.pop %v1202
        %v1297 = vtanh.pop %v1207
        %v1298 = vtanh.pop %v1210
        %v1299 = vtanh.pop %v1215
        %v1300 = vtanh.pop %v1218
        %v1301 = vtanh.pop %v1223
        %v1302 = vtanh.pop %v1226
        %v1303 = vtanh.pop %v1231
        %v1304 = vtanh.pop %v1234
        %v1305 = vtanh.pop %v1239
        %v1306 = vtanh.pop %v1242
        %v1307 = vtanh.pop %v1247
        %v1308 = vtanh.pop %v1250
        %v1309 = vtanh.pop %v1255
        %v1310 = vtanh.pop %v1258
        %v1311 = vtanh.pop %v1263
        %v1312 = vtanh.pop %v1266
        %v1313 = vtanh.pop %v1271
        %v1314 = vtanh.pop %v1274
        %v1315 = vtanh.pop %v1279
        %v1316 = vtanh.pop %v1282
        %s1317 = scalar_lea.vmem %s3, 256
        %v1318 = vld [vmem:[%s1317] sm:$0xff]
        %v1319 = vld [vmem:[%s1317 + $0x8] sm:$0xff]
        %v1320 = vld [vmem:[%s1317 + $0x10] sm:$0xff]
        %v1321 = vld [vmem:[%s1317 + $0x18] sm:$0xff]
        %v1322 = vld [vmem:[%s1317 + $0x20] sm:$0xff]
        %v1323 = vld [vmem:[%s1317 + $0x28] sm:$0xff]
        %v1324 = vld [vmem:[%s1317 + $0x30] sm:$0xff]
        %v1325 = vld [vmem:[%s1317 + $0x38] sm:$0xff]
        %v1326 = vld [vmem:[%s1317 + $0x40] sm:$0xff]
        %v1327 = vld [vmem:[%s1317 + $0x48] sm:$0xff]
        %v1328 = vld [vmem:[%s1317 + $0x50] sm:$0xff]
        %v1329 = vld [vmem:[%s1317 + $0x58] sm:$0xff]
        %v1330 = vld [vmem:[%s1317 + $0x60] sm:$0xff]
        %v1331 = vld [vmem:[%s1317 + $0x68] sm:$0xff]
        %v1332 = vld [vmem:[%s1317 + $0x70] sm:$0xff]
        %v1333 = vld [vmem:[%s1317 + $0x78] sm:$0xff]
        %v1334 = vld [vmem:[%s1317 + $0x80] sm:$0xff]
        %v1335 = vld [vmem:[%s1317 + $0x88] sm:$0xff]
        %v1336 = vld [vmem:[%s1317 + $0x90] sm:$0xff]
        %v1337 = vld [vmem:[%s1317 + $0x98] sm:$0xff]
        %v1338 = vld [vmem:[%s1317 + $0xa0] sm:$0xff]
        %v1339 = vld [vmem:[%s1317 + $0xa8] sm:$0xff]
        %v1340 = vld [vmem:[%s1317 + $0xb0] sm:$0xff]
        %v1341 = vld [vmem:[%s1317 + $0xb8] sm:$0xff]
        %v1342 = vld [vmem:[%s1317 + $0xc0] sm:$0xff]
        %v1343 = vld [vmem:[%s1317 + $0xc8] sm:$0xff]
        %v1344 = vld [vmem:[%s1317 + $0xd0] sm:$0xff]
        %v1345 = vld [vmem:[%s1317 + $0xd8] sm:$0xff]
        %v1346 = vld [vmem:[%s1317 + $0xe0] sm:$0xff]
        %v1347 = vld [vmem:[%s1317 + $0xe8] sm:$0xff]
        %v1348 = vld [vmem:[%s1317 + $0xf0] sm:$0xff]
        %v1349 = vld [vmem:[%s1317 + $0xf8] sm:$0xff]
        %v1350 = vpack.c.bf16 %v1286, %v1285
        %v1351 = vpack.c.bf16 %v1288, %v1287
        %v1352 = vpack.c.bf16 %v1290, %v1289
        %v1353 = vpack.c.bf16 %v1292, %v1291
        %v1354 = vpack.c.bf16 %v1294, %v1293
        %v1355 = vpack.c.bf16 %v1296, %v1295
        %v1356 = vpack.c.bf16 %v1298, %v1297
        %v1357 = vpack.c.bf16 %v1300, %v1299
        %v1358 = vpack.c.bf16 %v1302, %v1301
        %v1359 = vpack.c.bf16 %v1304, %v1303
        %v1360 = vpack.c.bf16 %v1306, %v1305
        %v1361 = vpack.c.bf16 %v1308, %v1307
        %v1362 = vpack.c.bf16 %v1310, %v1309
        %v1363 = vpack.c.bf16 %v1312, %v1311
        %v1364 = vpack.c.bf16 %v1314, %v1313
        %v1365 = vpack.c.bf16 %v1316, %v1315
        %s1366 = scalar_lea.vmem %s4, 256
        %v1367 = vld [vmem:[%s1366] sm:$0xff]
        %v1368 = vld [vmem:[%s1366 + $0x8] sm:$0xff]
        %v1369 = vld [vmem:[%s1366 + $0x10] sm:$0xff]
        %v1370 = vld [vmem:[%s1366 + $0x18] sm:$0xff]
        %v1371 = vld [vmem:[%s1366 + $0x20] sm:$0xff]
        %v1372 = vld [vmem:[%s1366 + $0x28] sm:$0xff]
        %v1373 = vld [vmem:[%s1366 + $0x30] sm:$0xff]
        %v1374 = vld [vmem:[%s1366 + $0x38] sm:$0xff]
        %v1375 = vld [vmem:[%s1366 + $0x40] sm:$0xff]
        %v1376 = vld [vmem:[%s1366 + $0x48] sm:$0xff]
        %v1377 = vld [vmem:[%s1366 + $0x50] sm:$0xff]
        %v1378 = vld [vmem:[%s1366 + $0x58] sm:$0xff]
        %v1379 = vld [vmem:[%s1366 + $0x60] sm:$0xff]
        %v1380 = vld [vmem:[%s1366 + $0x68] sm:$0xff]
        %v1381 = vld [vmem:[%s1366 + $0x70] sm:$0xff]
        %v1382 = vld [vmem:[%s1366 + $0x78] sm:$0xff]
        %v1383 = vld [vmem:[%s1366 + $0x80] sm:$0xff]
        %v1384 = vld [vmem:[%s1366 + $0x88] sm:$0xff]
        %v1385 = vld [vmem:[%s1366 + $0x90] sm:$0xff]
        %v1386 = vld [vmem:[%s1366 + $0x98] sm:$0xff]
        %v1387 = vld [vmem:[%s1366 + $0xa0] sm:$0xff]
        %v1388 = vld [vmem:[%s1366 + $0xa8] sm:$0xff]
        %v1389 = vld [vmem:[%s1366 + $0xb0] sm:$0xff]
        %v1390 = vld [vmem:[%s1366 + $0xb8] sm:$0xff]
        %v1391 = vld [vmem:[%s1366 + $0xc0] sm:$0xff]
        %v1392 = vld [vmem:[%s1366 + $0xc8] sm:$0xff]
        %v1393 = vld [vmem:[%s1366 + $0xd0] sm:$0xff]
        %v1394 = vld [vmem:[%s1366 + $0xd8] sm:$0xff]
        %v1395 = vld [vmem:[%s1366 + $0xe0] sm:$0xff]
        %v1396 = vld [vmem:[%s1366 + $0xe8] sm:$0xff]
        %v1397 = vld [vmem:[%s1366 + $0xf0] sm:$0xff]
        %v1398 = vld [vmem:[%s1366 + $0xf8] sm:$0xff]
        %1400 = vset.pattern.permute.xlu0 0
        %1401 = vperm.xlu0 %1400, %v1367
        %v1402 = vpop.permute.xlu0 %1401
        %1405 = vset.pattern.permute.xlu0 0
        %1406 = vperm.xlu0 %1405, %v1368
        %v1407 = vpop.permute.xlu0 %1406
        %1410 = vset.pattern.permute.xlu0 0
        %1411 = vperm.xlu0 %1410, %v1369
        %v1412 = vpop.permute.xlu0 %1411
        %1415 = vset.pattern.permute.xlu0 0
        %1416 = vperm.xlu0 %1415, %v1370
        %v1417 = vpop.permute.xlu0 %1416
        %1420 = vset.pattern.permute.xlu0 0
        %1421 = vperm.xlu0 %1420, %v1371
        %v1422 = vpop.permute.xlu0 %1421
        %1425 = vset.pattern.permute.xlu0 0
        %1426 = vperm.xlu0 %1425, %v1372
        %v1427 = vpop.permute.xlu0 %1426
        %1430 = vset.pattern.permute.xlu0 0
        %1431 = vperm.xlu0 %1430, %v1373
        %v1432 = vpop.permute.xlu0 %1431
        %1435 = vset.pattern.permute.xlu0 0
        %1436 = vperm.xlu0 %1435, %v1374
        %v1437 = vpop.permute.xlu0 %1436
        %1440 = vset.pattern.permute.xlu0 0
        %1441 = vperm.xlu0 %1440, %v1375
        %v1442 = vpop.permute.xlu0 %1441
        %1445 = vset.pattern.permute.xlu0 0
        %1446 = vperm.xlu0 %1445, %v1376
        %v1447 = vpop.permute.xlu0 %1446
        %1450 = vset.pattern.permute.xlu0 0
        %1451 = vperm.xlu0 %1450, %v1377
        %v1452 = vpop.permute.xlu0 %1451
        %1455 = vset.pattern.permute.xlu0 0
        %1456 = vperm.xlu0 %1455, %v1378
        %v1457 = vpop.permute.xlu0 %1456
        %1460 = vset.pattern.permute.xlu0 0
        %1461 = vperm.xlu0 %1460, %v1379
        %v1462 = vpop.permute.xlu0 %1461
        %1465 = vset.pattern.permute.xlu0 0
        %1466 = vperm.xlu0 %1465, %v1380
        %v1467 = vpop.permute.xlu0 %1466
        %1470 = vset.pattern.permute.xlu0 0
        %1471 = vperm.xlu0 %1470, %v1381
        %v1472 = vpop.permute.xlu0 %1471
        %1475 = vset.pattern.permute.xlu0 0
        %1476 = vperm.xlu0 %1475, %v1382
        %v1477 = vpop.permute.xlu0 %1476
        %1480 = vset.pattern.permute.xlu0 0
        %1481 = vperm.xlu0 %1480, %v1383
        %v1482 = vpop.permute.xlu0 %1481
        %1485 = vset.pattern.permute.xlu0 0
        %1486 = vperm.xlu0 %1485, %v1384
        %v1487 = vpop.permute.xlu0 %1486
        %1490 = vset.pattern.permute.xlu0 0
        %1491 = vperm.xlu0 %1490, %v1385
        %v1492 = vpop.permute.xlu0 %1491
        %1495 = vset.pattern.permute.xlu0 0
        %1496 = vperm.xlu0 %1495, %v1386
        %v1497 = vpop.permute.xlu0 %1496
        %1500 = vset.pattern.permute.xlu0 0
        %1501 = vperm.xlu0 %1500, %v1387
        %v1502 = vpop.permute.xlu0 %1501
        %1505 = vset.pattern.permute.xlu0 0
        %1506 = vperm.xlu0 %1505, %v1388
        %v1507 = vpop.permute.xlu0 %1506
        %1510 = vset.pattern.permute.xlu0 0
        %1511 = vperm.xlu0 %1510, %v1389
        %v1512 = vpop.permute.xlu0 %1511
        %1515 = vset.pattern.permute.xlu0 0
        %1516 = vperm.xlu0 %1515, %v1390
        %v1517 = vpop.permute.xlu0 %1516
        %1520 = vset.pattern.permute.xlu0 0
        %1521 = vperm.xlu0 %1520, %v1391
        %v1522 = vpop.permute.xlu0 %1521
        %1525 = vset.pattern.permute.xlu0 0
        %1526 = vperm.xlu0 %1525, %v1392
        %v1527 = vpop.permute.xlu0 %1526
        %1530 = vset.pattern.permute.xlu0 0
        %1531 = vperm.xlu0 %1530, %v1393
        %v1532 = vpop.permute.xlu0 %1531
        %1535 = vset.pattern.permute.xlu0 0
        %1536 = vperm.xlu0 %1535, %v1394
        %v1537 = vpop.permute.xlu0 %1536
        %1540 = vset.pattern.permute.xlu0 0
        %1541 = vperm.xlu0 %1540, %v1395
        %v1542 = vpop.permute.xlu0 %1541
        %1545 = vset.pattern.permute.xlu0 0
        %1546 = vperm.xlu0 %1545, %v1396
        %v1547 = vpop.permute.xlu0 %1546
        %1550 = vset.pattern.permute.xlu0 0
        %1551 = vperm.xlu0 %1550, %v1397
        %v1552 = vpop.permute.xlu0 %1551
        %1555 = vset.pattern.permute.xlu0 0
        %1556 = vperm.xlu0 %1555, %v1398
        %v1557 = vpop.permute.xlu0 %1556
        %v1591 = vunpack.c.l.b16 %v1318
        %v1592 = vunpack.c.h.b16 %v1318
        %v1593 = vunpack.c.l.b16 %v1319
        %v1594 = vunpack.c.h.b16 %v1319
        %v1595 = vunpack.c.l.b16 %v1320
        %v1596 = vunpack.c.h.b16 %v1320
        %v1597 = vunpack.c.l.b16 %v1321
        %v1598 = vunpack.c.h.b16 %v1321
        %v1599 = vunpack.c.l.b16 %v1322
        %v1600 = vunpack.c.h.b16 %v1322
        %v1601 = vunpack.c.l.b16 %v1323
        %v1602 = vunpack.c.h.b16 %v1323
        %v1603 = vunpack.c.l.b16 %v1324
        %v1604 = vunpack.c.h.b16 %v1324
        %v1605 = vunpack.c.l.b16 %v1325
        %v1606 = vunpack.c.h.b16 %v1325
        %v1607 = vunpack.c.l.b16 %v1326
        %v1608 = vunpack.c.h.b16 %v1326
        %v1609 = vunpack.c.l.b16 %v1327
        %v1610 = vunpack.c.h.b16 %v1327
        %v1611 = vunpack.c.l.b16 %v1328
        %v1612 = vunpack.c.h.b16 %v1328
        %v1613 = vunpack.c.l.b16 %v1329
        %v1614 = vunpack.c.h.b16 %v1329
        %v1615 = vunpack.c.l.b16 %v1330
        %v1616 = vunpack.c.h.b16 %v1330
        %v1617 = vunpack.c.l.b16 %v1331
        %v1618 = vunpack.c.h.b16 %v1331
        %v1619 = vunpack.c.l.b16 %v1332
        %v1620 = vunpack.c.h.b16 %v1332
        %v1621 = vunpack.c.l.b16 %v1333
        %v1622 = vunpack.c.h.b16 %v1333
        %v1623 = vunpack.c.l.b16 %v1334
        %v1624 = vunpack.c.h.b16 %v1334
        %v1625 = vunpack.c.l.b16 %v1335
        %v1626 = vunpack.c.h.b16 %v1335
        %v1627 = vunpack.c.l.b16 %v1336
        %v1628 = vunpack.c.h.b16 %v1336
        %v1629 = vunpack.c.l.b16 %v1337
        %v1630 = vunpack.c.h.b16 %v1337
        %v1631 = vunpack.c.l.b16 %v1338
        %v1632 = vunpack.c.h.b16 %v1338
        %v1633 = vunpack.c.l.b16 %v1339
        %v1634 = vunpack.c.h.b16 %v1339
        %v1635 = vunpack.c.l.b16 %v1340
        %v1636 = vunpack.c.h.b16 %v1340
        %v1637 = vunpack.c.l.b16 %v1341
        %v1638 = vunpack.c.h.b16 %v1341
        %v1639 = vunpack.c.l.b16 %v1342
        %v1640 = vunpack.c.h.b16 %v1342
        %v1641 = vunpack.c.l.b16 %v1343
        %v1642 = vunpack.c.h.b16 %v1343
        %v1643 = vunpack.c.l.b16 %v1344
        %v1644 = vunpack.c.h.b16 %v1344
        %v1645 = vunpack.c.l.b16 %v1345
        %v1646 = vunpack.c.h.b16 %v1345
        %v1647 = vunpack.c.l.b16 %v1346
        %v1648 = vunpack.c.h.b16 %v1346
        %v1649 = vunpack.c.l.b16 %v1347
        %v1650 = vunpack.c.h.b16 %v1347
        %v1651 = vunpack.c.l.b16 %v1348
        %v1652 = vunpack.c.h.b16 %v1348
        %v1653 = vunpack.c.l.b16 %v1349
        %v1654 = vunpack.c.h.b16 %v1349
        %v1655 = vpack.c.b16 %v1593, %v1591
        %v1656 = vpack.c.b16 %v1594, %v1592
        %v1657 = vpack.c.b16 %v1597, %v1595
        %v1658 = vpack.c.b16 %v1598, %v1596
        %v1659 = vpack.c.b16 %v1601, %v1599
        %v1660 = vpack.c.b16 %v1602, %v1600
        %v1661 = vpack.c.b16 %v1605, %v1603
        %v1662 = vpack.c.b16 %v1606, %v1604
        %v1663 = vpack.c.b16 %v1609, %v1607
        %v1664 = vpack.c.b16 %v1610, %v1608
        %v1665 = vpack.c.b16 %v1613, %v1611
        %v1666 = vpack.c.b16 %v1614, %v1612
        %v1667 = vpack.c.b16 %v1617, %v1615
        %v1668 = vpack.c.b16 %v1618, %v1616
        %v1669 = vpack.c.b16 %v1621, %v1619
        %v1670 = vpack.c.b16 %v1622, %v1620
        %v1671 = vpack.c.b16 %v1625, %v1623
        %v1672 = vpack.c.b16 %v1626, %v1624
        %v1673 = vpack.c.b16 %v1629, %v1627
        %v1674 = vpack.c.b16 %v1630, %v1628
        %v1675 = vpack.c.b16 %v1633, %v1631
        %v1676 = vpack.c.b16 %v1634, %v1632
        %v1677 = vpack.c.b16 %v1637, %v1635
        %v1678 = vpack.c.b16 %v1638, %v1636
        %v1679 = vpack.c.b16 %v1641, %v1639
        %v1680 = vpack.c.b16 %v1642, %v1640
        %v1681 = vpack.c.b16 %v1645, %v1643
        %v1682 = vpack.c.b16 %v1646, %v1644
        %v1683 = vpack.c.b16 %v1649, %v1647
        %v1684 = vpack.c.b16 %v1650, %v1648
        %v1685 = vpack.c.b16 %v1653, %v1651
        %v1686 = vpack.c.b16 %v1654, %v1652
        %1719 = vmatprep.subr.bf16.mxu0 0
        %1720 = vmatpush1.bf16.msra.mxu0 %v1350
        %1721 = vmatprep.subr.bf16.mxu0 0
        %1722 = vmatpush1.bf16.msra.mxu0 %v1351
        %1723 = vmatprep.subr.bf16.mxu0 0
        %1724 = vmatpush1.bf16.msra.mxu0 %v1352
        %1725 = vmatprep.subr.bf16.mxu0 0
        %1726 = vmatpush1.bf16.msra.mxu0 %v1353
        %1727 = vmatprep.subr.bf16.mxu0 0
        %1728 = vmatpush1.bf16.msra.mxu0 %v1354
        %1729 = vmatprep.subr.bf16.mxu0 0
        %1730 = vmatpush1.bf16.msra.mxu0 %v1355
        %1731 = vmatprep.subr.bf16.mxu0 0
        %1732 = vmatpush1.bf16.msra.mxu0 %v1356
        %1733 = vmatprep.subr.bf16.mxu0 0
        %1734 = vmatpush1.bf16.msra.mxu0 %v1357
        %1735 = vmatprep.subr.bf16.mxu0 0
        %1736 = vmatpush1.bf16.msra.mxu0 %v1358
        %1737 = vmatprep.subr.bf16.mxu0 0
        %1738 = vmatpush1.bf16.msra.mxu0 %v1359
        %1739 = vmatprep.subr.bf16.mxu0 0
        %1740 = vmatpush1.bf16.msra.mxu0 %v1360
        %1741 = vmatprep.subr.bf16.mxu0 0
        %1742 = vmatpush1.bf16.msra.mxu0 %v1361
        %1743 = vmatprep.subr.bf16.mxu0 0
        %1744 = vmatpush1.bf16.msra.mxu0 %v1362
        %1745 = vmatprep.subr.bf16.mxu0 0
        %1746 = vmatpush1.bf16.msra.mxu0 %v1363
        %1747 = vmatprep.subr.bf16.mxu0 0
        %1748 = vmatpush1.bf16.msra.mxu0 %v1364
        %1749 = vmatprep.subr.bf16.mxu0 0
        %1750 = vmatpush1.bf16.msra.mxu0 %v1365
        %1751 = vmatprep.mubr.bf16.mxu0 %v1656
        %1752 = vmatmul.mubr.bf16.gmra.mrb[0].mxu0 %v1655
        %v1753 = vpop.f32.mrb[0].mxu0
        %v1754 = vadd.f32 %v1402, %v1753
        %v1755 = vpop.f32.mrb[0].mxu0
        %v1756 = vpop.f32.mrb[0].mxu0
        %v1757 = vadd.f32 %v1407, %v1756
        %v1758 = vpop.f32.mrb[0].mxu0
        %1759 = vmatprep.mubr.bf16.mxu0 %v1658
        %1760 = vmatmul.mubr.bf16.gmra.mrb[0].mxu0 %v1657
        %v1761 = vpop.f32.mrb[0].mxu0
        %v1762 = vadd.f32 %v1412, %v1761
        %v1763 = vpop.f32.mrb[0].mxu0
        %v1764 = vpop.f32.mrb[0].mxu0
        %v1765 = vadd.f32 %v1417, %v1764
        %v1766 = vpop.f32.mrb[0].mxu0
        %1767 = vmatprep.mubr.bf16.mxu0 %v1660
        %1768 = vmatmul.mubr.bf16.gmra.mrb[0].mxu0 %v1659
        %v1769 = vpop.f32.mrb[0].mxu0
        %v1770 = vadd.f32 %v1422, %v1769
        %v1771 = vpop.f32.mrb[0].mxu0
        %v1772 = vpop.f32.mrb[0].mxu0
        %v1773 = vadd.f32 %v1427, %v1772
        %v1774 = vpop.f32.mrb[0].mxu0
        %1775 = vmatprep.mubr.bf16.mxu0 %v1662
        %1776 = vmatmul.mubr.bf16.gmra.mrb[0].mxu0 %v1661
        %v1777 = vpop.f32.mrb[0].mxu0
        %v1778 = vadd.f32 %v1432, %v1777
        %v1779 = vpop.f32.mrb[0].mxu0
        %v1780 = vpop.f32.mrb[0].mxu0
        %v1781 = vadd.f32 %v1437, %v1780
        %v1782 = vpop.f32.mrb[0].mxu0
        %1783 = vmatprep.mubr.bf16.mxu0 %v1664
        %1784 = vmatmul.mubr.bf16.gmra.mrb[0].mxu0 %v1663
        %v1785 = vpop.f32.mrb[0].mxu0
        %v1786 = vadd.f32 %v1442, %v1785
        %v1787 = vpop.f32.mrb[0].mxu0
        %v1788 = vpop.f32.mrb[0].mxu0
        %v1789 = vadd.f32 %v1447, %v1788
        %v1790 = vpop.f32.mrb[0].mxu0
        %1791 = vmatprep.mubr.bf16.mxu0 %v1666
        %1792 = vmatmul.mubr.bf16.gmra.mrb[0].mxu0 %v1665
        %v1793 = vpop.f32.mrb[0].mxu0
        %v1794 = vadd.f32 %v1452, %v1793
        %v1795 = vpop.f32.mrb[0].mxu0
        %v1796 = vpop.f32.mrb[0].mxu0
        %v1797 = vadd.f32 %v1457, %v1796
        %v1798 = vpop.f32.mrb[0].mxu0
        %1799 = vmatprep.mubr.bf16.mxu0 %v1668
        %1800 = vmatmul.mubr.bf16.gmra.mrb[0].mxu0 %v1667
        %v1801 = vpop.f32.mrb[0].mxu0
        %v1802 = vadd.f32 %v1462, %v1801
        %v1803 = vpop.f32.mrb[0].mxu0
        %v1804 = vpop.f32.mrb[0].mxu0
        %v1805 = vadd.f32 %v1467, %v1804
        %v1806 = vpop.f32.mrb[0].mxu0
        %1807 = vmatprep.mubr.bf16.mxu0 %v1670
        %1808 = vmatmul.mubr.bf16.gmra.mrb[0].mxu0 %v1669
        %v1809 = vpop.f32.mrb[0].mxu0
        %v1810 = vadd.f32 %v1472, %v1809
        %v1811 = vpop.f32.mrb[0].mxu0
        %v1812 = vpop.f32.mrb[0].mxu0
        %v1813 = vadd.f32 %v1477, %v1812
        %v1814 = vpop.f32.mrb[0].mxu0
        %1815 = vmatprep.mubr.bf16.mxu0 %v1672
        %1816 = vmatmul.mubr.bf16.gmra.mrb[0].mxu0 %v1671
        %v1817 = vpop.f32.mrb[0].mxu0
        %v1818 = vadd.f32 %v1482, %v1817
        %v1819 = vpop.f32.mrb[0].mxu0
        %v1820 = vpop.f32.mrb[0].mxu0
        %v1821 = vadd.f32 %v1487, %v1820
        %v1822 = vpop.f32.mrb[0].mxu0
        %1823 = vmatprep.mubr.bf16.mxu0 %v1674
        %1824 = vmatmul.mubr.bf16.gmra.mrb[0].mxu0 %v1673
        %v1825 = vpop.f32.mrb[0].mxu0
        %v1826 = vadd.f32 %v1492, %v1825
        %v1827 = vpop.f32.mrb[0].mxu0
        %v1828 = vpop.f32.mrb[0].mxu0
        %v1829 = vadd.f32 %v1497, %v1828
        %v1830 = vpop.f32.mrb[0].mxu0
        %1831 = vmatprep.mubr.bf16.mxu0 %v1676
        %1832 = vmatmul.mubr.bf16.gmra.mrb[0].mxu0 %v1675
        %v1833 = vpop.f32.mrb[0].mxu0
        %v1834 = vadd.f32 %v1502, %v1833
        %v1835 = vpop.f32.mrb[0].mxu0
        %v1836 = vpop.f32.mrb[0].mxu0
        %v1837 = vadd.f32 %v1507, %v1836
        %v1838 = vpop.f32.mrb[0].mxu0
        %1839 = vmatprep.mubr.bf16.mxu0 %v1678
        %1840 = vmatmul.mubr.bf16.gmra.mrb[0].mxu0 %v1677
        %v1841 = vpop.f32.mrb[0].mxu0
        %v1842 = vadd.f32 %v1512, %v1841
        %v1843 = vpop.f32.mrb[0].mxu0
        %v1844 = vpop.f32.mrb[0].mxu0
        %v1845 = vadd.f32 %v1517, %v1844
        %v1846 = vpop.f32.mrb[0].mxu0
        %1847 = vmatprep.mubr.bf16.mxu0 %v1680
        %1848 = vmatmul.mubr.bf16.gmra.mrb[0].mxu0 %v1679
        %v1849 = vpop.f32.mrb[0].mxu0
        %v1850 = vadd.f32 %v1522, %v1849
        %v1851 = vpop.f32.mrb[0].mxu0
        %v1852 = vpop.f32.mrb[0].mxu0
        %v1853 = vadd.f32 %v1527, %v1852
        %v1854 = vpop.f32.mrb[0].mxu0
        %1855 = vmatprep.mubr.bf16.mxu0 %v1682
        %1856 = vmatmul.mubr.bf16.gmra.mrb[0].mxu0 %v1681
        %v1857 = vpop.f32.mrb[0].mxu0
        %v1858 = vadd.f32 %v1532, %v1857
        %v1859 = vpop.f32.mrb[0].mxu0
        %v1860 = vpop.f32.mrb[0].mxu0
        %v1861 = vadd.f32 %v1537, %v1860
        %v1862 = vpop.f32.mrb[0].mxu0
        %1863 = vmatprep.mubr.bf16.mxu0 %v1684
        %1864 = vmatmul.mubr.bf16.gmra.mrb[0].mxu0 %v1683
        %v1865 = vpop.f32.mrb[0].mxu0
        %v1866 = vadd.f32 %v1542, %v1865
        %v1867 = vpop.f32.mrb[0].mxu0
        %v1868 = vpop.f32.mrb[0].mxu0
        %v1869 = vadd.f32 %v1547, %v1868
        %v1870 = vpop.f32.mrb[0].mxu0
        %1871 = vmatprep.mubr.bf16.mxu0 %v1686
        %1872 = vmatmul.mubr.bf16.gmra.mrb[0].mxu0 %v1685
        %v1873 = vpop.f32.mrb[0].mxu0
        %v1874 = vadd.f32 %v1552, %v1873
        %v1875 = vpop.f32.mrb[0].mxu0
        %v1876 = vpop.f32.mrb[0].mxu0
        %v1877 = vadd.f32 %v1557, %v1876
        %v1878 = vpop.f32.mrb[0].mxu0
        %1879 = vdwg.mxu0
        %v1880 = vtanh.pop %v1754
        %v1881 = vtanh.pop %v1757
        %v1882 = vtanh.pop %v1762
        %v1883 = vtanh.pop %v1765
        %v1884 = vtanh.pop %v1770
        %v1885 = vtanh.pop %v1773
        %v1886 = vtanh.pop %v1778
        %v1887 = vtanh.pop %v1781
        %v1888 = vtanh.pop %v1786
        %v1889 = vtanh.pop %v1789
        %v1890 = vtanh.pop %v1794
        %v1891 = vtanh.pop %v1797
        %v1892 = vtanh.pop %v1802
        %v1893 = vtanh.pop %v1805
        %v1894 = vtanh.pop %v1810
        %v1895 = vtanh.pop %v1813
        %v1896 = vtanh.pop %v1818
        %v1897 = vtanh.pop %v1821
        %v1898 = vtanh.pop %v1826
        %v1899 = vtanh.pop %v1829
        %v1900 = vtanh.pop %v1834
        %v1901 = vtanh.pop %v1837
        %v1902 = vtanh.pop %v1842
        %v1903 = vtanh.pop %v1845
        %v1904 = vtanh.pop %v1850
        %v1905 = vtanh.pop %v1853
        %v1906 = vtanh.pop %v1858
        %v1907 = vtanh.pop %v1861
        %v1908 = vtanh.pop %v1866
        %v1909 = vtanh.pop %v1869
        %v1910 = vtanh.pop %v1874
        %v1911 = vtanh.pop %v1877
        %v1912 = vld [vmem:[%s5] sm:$0xff]
        %v1913 = vld [vmem:[%s5 + $0x8] sm:$0xff]
        %v1914 = vld [vmem:[%s5 + $0x10] sm:$0xff]
        %v1915 = vld [vmem:[%s5 + $0x18] sm:$0xff]
        %v1916 = vld [vmem:[%s5 + $0x20] sm:$0xff]
        %v1917 = vld [vmem:[%s5 + $0x28] sm:$0xff]
        %v1918 = vld [vmem:[%s5 + $0x30] sm:$0xff]
        %v1919 = vld [vmem:[%s5 + $0x38] sm:$0xff]
        %v1920 = vld [vmem:[%s5 + $0x40] sm:$0xff]
        %v1921 = vld [vmem:[%s5 + $0x48] sm:$0xff]
        %v1922 = vld [vmem:[%s5 + $0x50] sm:$0xff]
        %v1923 = vld [vmem:[%s5 + $0x58] sm:$0xff]
        %v1924 = vld [vmem:[%s5 + $0x60] sm:$0xff]
        %v1925 = vld [vmem:[%s5 + $0x68] sm:$0xff]
        %v1926 = vld [vmem:[%s5 + $0x70] sm:$0xff]
        %v1927 = vld [vmem:[%s5 + $0x78] sm:$0xff]
        %v1928 = vld [vmem:[%s5 + $0x80] sm:$0xff]
        %v1929 = vld [vmem:[%s5 + $0x88] sm:$0xff]
        %v1930 = vld [vmem:[%s5 + $0x90] sm:$0xff]
        %v1931 = vld [vmem:[%s5 + $0x98] sm:$0xff]
        %v1932 = vld [vmem:[%s5 + $0xa0] sm:$0xff]
        %v1933 = vld [vmem:[%s5 + $0xa8] sm:$0xff]
        %v1934 = vld [vmem:[%s5 + $0xb0] sm:$0xff]
        %v1935 = vld [vmem:[%s5 + $0xb8] sm:$0xff]
        %v1936 = vld [vmem:[%s5 + $0xc0] sm:$0xff]
        %v1937 = vld [vmem:[%s5 + $0xc8] sm:$0xff]
        %v1938 = vld [vmem:[%s5 + $0xd0] sm:$0xff]
        %v1939 = vld [vmem:[%s5 + $0xd8] sm:$0xff]
        %v1940 = vld [vmem:[%s5 + $0xe0] sm:$0xff]
        %v1941 = vld [vmem:[%s5 + $0xe8] sm:$0xff]
        %v1942 = vld [vmem:[%s5 + $0xf0] sm:$0xff]
        %v1943 = vld [vmem:[%s5 + $0xf8] sm:$0xff]
        %1945 = vset.pattern.permute.xlu0 0
        %1946 = vperm.xlu0 %1945, %v1912
        %v1947 = vpop.permute.xlu0 %1946
        %1950 = vset.pattern.permute.xlu0 0
        %1951 = vperm.xlu0 %1950, %v1913
        %v1952 = vpop.permute.xlu0 %1951
        %1955 = vset.pattern.permute.xlu0 0
        %1956 = vperm.xlu0 %1955, %v1914
        %v1957 = vpop.permute.xlu0 %1956
        %1960 = vset.pattern.permute.xlu0 0
        %1961 = vperm.xlu0 %1960, %v1915
        %v1962 = vpop.permute.xlu0 %1961
        %1965 = vset.pattern.permute.xlu0 0
        %1966 = vperm.xlu0 %1965, %v1916
        %v1967 = vpop.permute.xlu0 %1966
        %1970 = vset.pattern.permute.xlu0 0
        %1971 = vperm.xlu0 %1970, %v1917
        %v1972 = vpop.permute.xlu0 %1971
        %1975 = vset.pattern.permute.xlu0 0
        %1976 = vperm.xlu0 %1975, %v1918
        %v1977 = vpop.permute.xlu0 %1976
        %1980 = vset.pattern.permute.xlu0 0
        %1981 = vperm.xlu0 %1980, %v1919
        %v1982 = vpop.permute.xlu0 %1981
        %1985 = vset.pattern.permute.xlu0 0
        %1986 = vperm.xlu0 %1985, %v1920
        %v1987 = vpop.permute.xlu0 %1986
        %1990 = vset.pattern.permute.xlu0 0
        %1991 = vperm.xlu0 %1990, %v1921
        %v1992 = vpop.permute.xlu0 %1991
        %1995 = vset.pattern.permute.xlu0 0
        %1996 = vperm.xlu0 %1995, %v1922
        %v1997 = vpop.permute.xlu0 %1996
        %2000 = vset.pattern.permute.xlu0 0
        %2001 = vperm.xlu0 %2000, %v1923
        %v2002 = vpop.permute.xlu0 %2001
        %2005 = vset.pattern.permute.xlu0 0
        %2006 = vperm.xlu0 %2005, %v1924
        %v2007 = vpop.permute.xlu0 %2006
        %2010 = vset.pattern.permute.xlu0 0
        %2011 = vperm.xlu0 %2010, %v1925
        %v2012 = vpop.permute.xlu0 %2011
        %2015 = vset.pattern.permute.xlu0 0
        %2016 = vperm.xlu0 %2015, %v1926
        %v2017 = vpop.permute.xlu0 %2016
        %2020 = vset.pattern.permute.xlu0 0
        %2021 = vperm.xlu0 %2020, %v1927
        %v2022 = vpop.permute.xlu0 %2021
        %2025 = vset.pattern.permute.xlu0 0
        %2026 = vperm.xlu0 %2025, %v1928
        %v2027 = vpop.permute.xlu0 %2026
        %2030 = vset.pattern.permute.xlu0 0
        %2031 = vperm.xlu0 %2030, %v1929
        %v2032 = vpop.permute.xlu0 %2031
        %2035 = vset.pattern.permute.xlu0 0
        %2036 = vperm.xlu0 %2035, %v1930
        %v2037 = vpop.permute.xlu0 %2036
        %2040 = vset.pattern.permute.xlu0 0
        %2041 = vperm.xlu0 %2040, %v1931
        %v2042 = vpop.permute.xlu0 %2041
        %2045 = vset.pattern.permute.xlu0 0
        %2046 = vperm.xlu0 %2045, %v1932
        %v2047 = vpop.permute.xlu0 %2046
        %2050 = vset.pattern.permute.xlu0 0
        %2051 = vperm.xlu0 %2050, %v1933
        %v2052 = vpop.permute.xlu0 %2051
        %2055 = vset.pattern.permute.xlu0 0
        %2056 = vperm.xlu0 %2055, %v1934
        %v2057 = vpop.permute.xlu0 %2056
        %2060 = vset.pattern.permute.xlu0 0
        %2061 = vperm.xlu0 %2060, %v1935
        %v2062 = vpop.permute.xlu0 %2061
        %2065 = vset.pattern.permute.xlu0 0
        %2066 = vperm.xlu0 %2065, %v1936
        %v2067 = vpop.permute.xlu0 %2066
        %2070 = vset.pattern.permute.xlu0 0
        %2071 = vperm.xlu0 %2070, %v1937
        %v2072 = vpop.permute.xlu0 %2071
        %2075 = vset.pattern.permute.xlu0 0
        %2076 = vperm.xlu0 %2075, %v1938
        %v2077 = vpop.permute.xlu0 %2076
        %2080 = vset.pattern.permute.xlu0 0
        %2081 = vperm.xlu0 %2080, %v1939
        %v2082 = vpop.permute.xlu0 %2081
        %2085 = vset.pattern.permute.xlu0 0
        %2086 = vperm.xlu0 %2085, %v1940
        %v2087 = vpop.permute.xlu0 %2086
        %2090 = vset.pattern.permute.xlu0 0
        %2091 = vperm.xlu0 %2090, %v1941
        %v2092 = vpop.permute.xlu0 %2091
        %2095 = vset.pattern.permute.xlu0 0
        %2096 = vperm.xlu0 %2095, %v1942
        %v2097 = vpop.permute.xlu0 %2096
        %2100 = vset.pattern.permute.xlu0 0
        %2101 = vperm.xlu0 %2100, %v1943
        %v2102 = vpop.permute.xlu0 %2101
        %v2104 = vmul.f32 %v1947, %v1880
        %v2105 = vmul.f32 %v1952, %v1881
        %v2106 = vmul.f32 %v1957, %v1882
        %v2107 = vmul.f32 %v1962, %v1883
        %v2108 = vmul.f32 %v1967, %v1884
        %v2109 = vmul.f32 %v1972, %v1885
        %v2110 = vmul.f32 %v1977, %v1886
        %v2111 = vmul.f32 %v1982, %v1887
        %v2112 = vmul.f32 %v1987, %v1888
        %v2113 = vmul.f32 %v1992, %v1889
        %v2114 = vmul.f32 %v1997, %v1890
        %v2115 = vmul.f32 %v2002, %v1891
        %v2116 = vmul.f32 %v2007, %v1892
        %v2117 = vmul.f32 %v2012, %v1893
        %v2118 = vmul.f32 %v2017, %v1894
        %v2119 = vmul.f32 %v2022, %v1895
        %v2120 = vmul.f32 %v2027, %v1896
        %v2121 = vmul.f32 %v2032, %v1897
        %v2122 = vmul.f32 %v2037, %v1898
        %v2123 = vmul.f32 %v2042, %v1899
        %v2124 = vmul.f32 %v2047, %v1900
        %v2125 = vmul.f32 %v2052, %v1901
        %v2126 = vmul.f32 %v2057, %v1902
        %v2127 = vmul.f32 %v2062, %v1903
        %v2128 = vmul.f32 %v2067, %v1904
        %v2129 = vmul.f32 %v2072, %v1905
        %v2130 = vmul.f32 %v2077, %v1906
        %v2131 = vmul.f32 %v2082, %v1907
        %v2132 = vmul.f32 %v2087, %v1908
        %v2133 = vmul.f32 %v2092, %v1909
        %v2134 = vmul.f32 %v2097, %v1910
        %v2135 = vmul.f32 %v2102, %v1911
        %v2136 = vadd.f32 %v2104, %v2105
        %v2137 = vadd.f32 %v2136, %v2106
        %v2138 = vadd.f32 %v2137, %v2107
        %v2139 = vrot.slane %v2138, 4
        %v2140 = vadd.f32 %v2138, %v2139
        %v2141 = vrot.slane %v2140, 2
        %v2142 = vadd.f32 %v2140, %v2141
        %v2143 = vrot.slane %v2142, 1
        %v2144 = vadd.f32 %v2142, %v2143
        %v2145 = vadd.f32 %v2108, %v2109
        %v2146 = vadd.f32 %v2145, %v2110
        %v2147 = vadd.f32 %v2146, %v2111
        %v2148 = vrot.slane %v2147, 4
        %v2149 = vadd.f32 %v2147, %v2148
        %v2150 = vrot.slane %v2149, 2
        %v2151 = vadd.f32 %v2149, %v2150
        %v2152 = vrot.slane %v2151, 1
        %v2153 = vadd.f32 %v2151, %v2152
        %v2154 = vadd.f32 %v2112, %v2113
        %v2155 = vadd.f32 %v2154, %v2114
        %v2156 = vadd.f32 %v2155, %v2115
        %v2157 = vrot.slane %v2156, 4
        %v2158 = vadd.f32 %v2156, %v2157
        %v2159 = vrot.slane %v2158, 2
        %v2160 = vadd.f32 %v2158, %v2159
        %v2161 = vrot.slane %v2160, 1
        %v2162 = vadd.f32 %v2160, %v2161
        %v2163 = vadd.f32 %v2116, %v2117
        %v2164 = vadd.f32 %v2163, %v2118
        %v2165 = vadd.f32 %v2164, %v2119
        %v2166 = vrot.slane %v2165, 4
        %v2167 = vadd.f32 %v2165, %v2166
        %v2168 = vrot.slane %v2167, 2
        %v2169 = vadd.f32 %v2167, %v2168
        %v2170 = vrot.slane %v2169, 1
        %v2171 = vadd.f32 %v2169, %v2170
        %v2172 = vadd.f32 %v2120, %v2121
        %v2173 = vadd.f32 %v2172, %v2122
        %v2174 = vadd.f32 %v2173, %v2123
        %v2175 = vrot.slane %v2174, 4
        %v2176 = vadd.f32 %v2174, %v2175
        %v2177 = vrot.slane %v2176, 2
        %v2178 = vadd.f32 %v2176, %v2177
        %v2179 = vrot.slane %v2178, 1
        %v2180 = vadd.f32 %v2178, %v2179
        %v2181 = vadd.f32 %v2124, %v2125
        %v2182 = vadd.f32 %v2181, %v2126
        %v2183 = vadd.f32 %v2182, %v2127
        %v2184 = vrot.slane %v2183, 4
        %v2185 = vadd.f32 %v2183, %v2184
        %v2186 = vrot.slane %v2185, 2
        %v2187 = vadd.f32 %v2185, %v2186
        %v2188 = vrot.slane %v2187, 1
        %v2189 = vadd.f32 %v2187, %v2188
        %v2190 = vadd.f32 %v2128, %v2129
        %v2191 = vadd.f32 %v2190, %v2130
        %v2192 = vadd.f32 %v2191, %v2131
        %v2193 = vrot.slane %v2192, 4
        %v2194 = vadd.f32 %v2192, %v2193
        %v2195 = vrot.slane %v2194, 2
        %v2196 = vadd.f32 %v2194, %v2195
        %v2197 = vrot.slane %v2196, 1
        %v2198 = vadd.f32 %v2196, %v2197
        %v2199 = vadd.f32 %v2132, %v2133
        %v2200 = vadd.f32 %v2199, %v2134
        %v2201 = vadd.f32 %v2200, %v2135
        %v2202 = vrot.slane %v2201, 4
        %v2203 = vadd.f32 %v2201, %v2202
        %v2204 = vrot.slane %v2203, 2
        %v2205 = vadd.f32 %v2203, %v2204
        %v2206 = vrot.slane %v2205, 1
        %v2207 = vadd.f32 %v2205, %v2206
        %v2208 = vld [vmem:[#allocation2] sm:$0x1]
        %v2210 = vlaneseq
        %v2211 = vshrl.u32 %v2210, 7
        %v2212 = vsub.s32 0, %v2211
        %v2213 = vrot.slane %v2208, %v2212
        %2214 = vset.pattern.permute.xlu0 0
        %2215 = vperm.xlu0 %2214, %v2213
        %v2216 = vpop.permute.xlu0 %2215
        %v2218 = vadd.f32 %v2144, %v2216
        %v2219 = vadd.f32 %v2153, %v2216
        %v2220 = vadd.f32 %v2162, %v2216
        %v2221 = vadd.f32 %v2171, %v2216
        %v2222 = vadd.f32 %v2180, %v2216
        %v2223 = vadd.f32 %v2189, %v2216
        %v2224 = vadd.f32 %v2198, %v2216
        %v2225 = vadd.f32 %v2207, %v2216
        %vm2234 = vcmask 1041409
        %v2235 = vsel %vm2234, %v2219, %v2218
        %vm2236 = vcmask 1042434
        %v2237 = vsel %vm2236, %v2220, %v2235
        %vm2238 = vcmask 1043459
        %v2239 = vsel %vm2238, %v2221, %v2237
        %vm2240 = vcmask 1044484
        %v2241 = vsel %vm2240, %v2222, %v2239
        %vm2242 = vcmask 1045509
        %v2243 = vsel %vm2242, %v2223, %v2241
        %vm2244 = vcmask 1046534
        %v2245 = vsel %vm2244, %v2224, %v2243
        %vm2246 = vcmask 1047559
        %v2247 = vsel %vm2246, %v2225, %v2245
        %2249 = vst [vmem:[%s316] sm:$0xff] %v2247
        %s2250 = sand.u32 %s183, 1
        %s2251 = scalar_lea.sflag [#allocation5], %s2250
        %s2252 = sand.u32 %s183, 1
        %s2253 = smul.addr %s2252, 8
        %s2254 = scalar_lea.vmem [#allocation4], %s2253
        // Predicated region
        $region87: #{tpu_custom_call.1} parent=81 // pred_check
          %p2255 = pneg %p193
        $region88: #{tpu_custom_call.1} parent=81 // pred_check_branch
          %2257 = sbr.rel (%p2255) target = $region90
        $region89: #{tpu_custom_call.1} parent=81 // pred_region
          %s2259 = ssub.s32 128, 128
          %2260 = vsyncadd %s2251, %s2259
          %s2261 = smul.addr %s23, 128
          %s2262 = scalar_lea.hbm %s7, %s2261
          %s2264 = sshll.u32 %s2254, 4
          %s2265 = int_to_ptr.vmem [resolvable:$true] %s2264
          %2267 = dma.vmem_to_hbm [thread:$0]  %s2265, 128, %s2262, %s2251
        $region90: #{tpu_custom_call.1} parent=81 // pred_fallthru
          _
      $region82: #{tpu_custom_call.1} parent=5 // pred_fallthru
        _
      %p2268 = scmp.le.s32.totalorder 2, %s18
      // Predicated region
      $region91: #{tpu_custom_call.1} parent=5 // pred_check
        %p2269 = pneg %p2268
      $region92: #{tpu_custom_call.1} parent=5 // pred_check_branch
        %2271 = sbr.rel (%p2269) target = $region94
      $region93: #{tpu_custom_call.1} parent=5 // pred_region
        %s2272 = ssub.s32 %s18, 2
        // Predicated region
        $region95: #{tpu_custom_call.1} parent=93 // pred_check
          %p2273 = pneg %p199
        $region96: #{tpu_custom_call.1} parent=93 // pred_check_branch
          %2275 = sbr.rel (%p2273) target = $region98
        $region97: #{tpu_custom_call.1} parent=93 // pred_region
          %s2276 = sand.u32 %s184, 1
          %s2277 = scalar_lea.sflag [#allocation5], %s2276
          %s2278 = sand.u32 %s184, 1
          %s2279 = smul.addr %s2278, 8
          %s2280 = scalar_lea.vmem [#allocation4], %s2279
          %2281 = dma.done %s2277, 128
        $region98: #{tpu_custom_call.1} parent=93 // pred_fallthru
          _
      $region94: #{tpu_custom_call.1} parent=5 // pred_fallthru
        _
    $region6: #{tpu_custom_call.1} parent=1 // loop_footer
      %s22 = sadd.s32 1, %s18
    $region7: #{tpu_custom_call.1} parent=1 // loop_footer_branch
      %17 = sbr.rel target = $region3
    $region8: #{tpu_custom_call.1} parent=1 // loop_exit
      _
    %2282 = vsyncpa [#allocation5], 1
    %s2283 = scalar_lea.sflag [#allocation5], 1
    %2284 = vsyncpa %s2283, 1

</llo_original>
